<compile_context>
chip_gen: v7x
topology: tpu7x:2x2x1
jax: 0.10.0
libtpu: 0.0.40
codegen_flags: <defaults>
</compile_context>

<pallas_src>
import functools

import jax
import jax.numpy as jnp
from jax.experimental import pallas as pl
from jax.experimental.pallas import tpu as pltpu

OUTPUT_DIM = 2
OUT_PAD = 128         # final projection written into a lane-dense 128-wide slab
LN_EPS = 1e-5


def _round_up(n, m):
    return ((n + m - 1) // m) * m


def _pick_batch_tile(batch, dim, hidden, *, max_tb=1024,
                     vmem_budget_bytes=12 << 20, min_grid_steps=2):
    """Largest batch tile that fits the VMEM budget and keeps the grid useful.

    Live-VMEM per batch row ~= double-buffered bf16 x/out tiles plus roughly
    three f32 (row, hidden) LayerNorm/ReLU/matmul temporaries; single-buffered
    weights (~1.2 MB at H=512) live inside the remaining budget headroom.
    """
    per_row = 2 * 2 * dim + 2 * 2 * OUT_PAD + 3 * 4 * hidden
    cap = max(128, (vmem_budget_bytes // per_row) // 128 * 128)
    tb = min(max_tb, cap)
    if batch >= 2 * 128:
        # keep >= min_grid_steps steps so the "parallel" batch axis can shard
        # across both TensorCores on v7x (harmless on v5e/v6e)
        steps_tile = _round_up(-(-batch // min_grid_steps), 128)
        tb = min(tb, max(128, steps_tile))
    # don't pad a tiny batch up to a huge tile (TB only needs to be a mult of 8)
    tb = min(tb, _round_up(batch, 8))
    return tb


def _layernorm(h, gamma, beta):
    # PyTorch nn.LayerNorm: biased variance over the last dim, eps inside rsqrt.
    # Single-pass variance (E[h^2] - mu^2): the two cross-lane XLU reductions
    # issue back-to-back instead of serializing through mu.  All f32.
    mu = jnp.mean(h, axis=-1, keepdims=True)
    var = jnp.maximum(jnp.mean(h * h, axis=-1, keepdims=True) - mu * mu, 0.0)
    return (h - mu) * jax.lax.rsqrt(var + LN_EPS) * gamma + beta


def mlp_kernel(x_ref, w_in_ref, w12_ref, vec_ref, o_ref):
    """Fused MLP forward for one (TB, dim) batch tile.

    vec_ref rows (f32, (12, H)):
      0 head_b | 1 ln1_g | 2 ln1_b | 3 b1 | 4 ln2_g | 5 ln2_b | 6 b2
      7 ln3_g | 8 ln3_b | 9 b3 (zero-padded to H lanes) | 10 w3[:,0] | 11 w3[:,1]
    """

    def matmul(a, w):
        # MXU inputs follow the weight dtype (bf16 on the fast path); accumulation
        # and all surrounding elementwise math stay f32.
        return jnp.dot(a.astype(w.dtype), w, preferred_element_type=jnp.float32)

    vec = vec_ref[...]                      # (12, H) f32, VMEM-resident
    x = x_ref[...]                          # (TB, dim) bf16 (or f32)

    # input head: Linear(dim -> hidden)
    h = matmul(x, w_in_ref[...]) + vec[0:1, :]

    # block 1: LN -> ReLU -> Linear(hidden -> hidden)
    h = _layernorm(h, vec[1:2, :], vec[2:3, :])
    h = jnp.maximum(h, 0.0)
    h = matmul(h, w12_ref[0]) + vec[3:4, :]

    # block 2: LN -> ReLU -> Linear(hidden -> hidden)
    h = _layernorm(h, vec[4:5, :], vec[5:6, :])
    h = jnp.maximum(h, 0.0)
    h = matmul(h, w12_ref[1]) + vec[6:7, :]

    # block 3: LN -> ReLU -> Linear(hidden -> 2) on the VPU/XLU (MXU has no work
    # here worth doing: 126/128 columns of a padded matmul would be zeros).
    h = _layernorm(h, vec[7:8, :], vec[8:9, :])
    h = jnp.maximum(h, 0.0)
    c0 = jnp.sum(h * vec[10:11, :], axis=-1, keepdims=True)   # (TB, 1) f32
    c1 = jnp.sum(h * vec[11:12, :], axis=-1, keepdims=True)   # (TB, 1) f32
    lane = jax.lax.broadcasted_iota(jnp.int32, (1, OUT_PAD), 1)
    out = jnp.where(lane == 0, c0, jnp.where(lane == 1, c1, 0.0))
    out = out + vec[9:10, :OUT_PAD]          # b3 lives in lanes 0..1, zeros elsewhere

    o_ref[...] = out.astype(o_ref.dtype)     # lane-dense, unmasked bf16 stores


@functools.partial(jax.jit, static_argnames=("subset", "use_bf16_matmul", "max_tb"))
def mlp_forward(x, params, subset, use_bf16_matmul=True, max_tb=1024):
    """Runs MLP.forward(x, subset) fully fused in one Pallas kernel.

    The string-keyed head dispatch is a static Python-level choice, mirroring
    `self.input_heads[subset]` in the PyTorch module.
    """
    head_w, head_b = params["input_heads"][subset]
    dim, H = head_w.shape
    assert H % 128 == 0 and H >= OUT_PAD, "hidden_dim must be a lane-dense multiple of 128"

    mm_dtype = jnp.bfloat16 if use_bf16_matmul else jnp.float32

    # --- pack parameters into few, lane-dense operands (done once under jit) ---
    # NOTE: gamma/beta cannot be folded into the following Linear weights because
    # a ReLU sits between the LN affine and the Linear.
    b3_pad = jnp.zeros((1, H), jnp.float32).at[:, :OUTPUT_DIM].set(params["b3"])
    vec = jnp.concatenate(
        [head_b,
         params["ln1_g"], params["ln1_b"], params["b1"],
         params["ln2_g"], params["ln2_b"], params["b2"],
         params["ln3_g"], params["ln3_b"],
         b3_pad,
         params["w3"].T],                                       # rows 10..11: w3 columns
        axis=0)                                                 # (12, H) f32

    w_in = head_w.astype(mm_dtype)                                  # (dim, H)
    w12 = jnp.stack([params["w1"], params["w2"]]).astype(mm_dtype)  # (2, H, H)

    # Cast x in the wrapper: the kernel truncates at the first matmul anyway,
    # so precision is identical while HBM/VMEM bytes for x are halved.
    x = x.astype(mm_dtype)

    # --- pick batch tile and pad the batch to a multiple of it ---
    batch = x.shape[0]
    tb = _pick_batch_tile(batch, dim, H, max_tb=max_tb)
    padded = _round_up(batch, tb)
    if padded != batch:
        # Zero rows hit LayerNorm with ~zero variance; rsqrt(var + LN_EPS) is
        # finite because LN_EPS > 0, and the rows are sliced off below.
        x = jnp.pad(x, ((0, padded - batch), (0, 0)))
    grid = (padded // tb,)

    out = pl.pallas_call(
        mlp_kernel,
        out_shape=jax.ShapeDtypeStruct((padded, OUT_PAD), mm_dtype),
        grid=grid,
        in_specs=[
            pl.BlockSpec((tb, dim), lambda i: (i, 0)),        # x: tiled over batch
            # batch-invariant operands: DMA'd once, single VMEM buffer
            pl.BlockSpec((dim, H), lambda i: (0, 0),
                         pipeline_mode=pl.Buffered(1)),       # head weight
            pl.BlockSpec((2, H, H), lambda i: (0, 0, 0),
                         pipeline_mode=pl.Buffered(1)),       # stacked hidden weights
            pl.BlockSpec((12, H), lambda i: (0, 0),
                         pipeline_mode=pl.Buffered(1)),       # packed biases/LN/w3-cols
        ],
        out_specs=pl.BlockSpec((tb, OUT_PAD), lambda i: (i, 0)),
        compiler_params=pltpu.CompilerParams(
            dimension_semantics=("parallel",)),               # shards across TCs on v7x
    )(x, w_in, w12, vec)

    return out[:batch, :OUTPUT_DIM].astype(jnp.float32)


def init_params(key, subset_dims, hidden_dim=512, output_dim=OUTPUT_DIM):
    """Deterministic synthetic parameter init (matches PyTorch module shapes)."""
    params = {"input_heads": {}}
    keys = jax.random.split(key, 2 * len(subset_dims) + 8)
    i = 0
    for subset, dim in sorted(subset_dims.items()):
        w = jax.random.normal(keys[i], (dim, hidden_dim), jnp.float32) * 0.05
        b = jax.random.normal(keys[i + 1], (1, hidden_dim), jnp.float32) * 0.01
        params["input_heads"][subset] = (w, b)
        i += 2
    # LayerNorm affine params (gamma=1, beta=0 like PyTorch default init)
    for n in ("1", "2", "3"):
        params[f"ln{n}_g"] = jnp.ones((1, hidden_dim), jnp.float32)
        params[f"ln{n}_b"] = jnp.zeros((1, hidden_dim), jnp.float32)
    # hidden / output Linears (stored as (in_features, out_features))
    params["w1"] = jax.random.normal(keys[i + 0], (hidden_dim, hidden_dim), jnp.float32) * 0.05
    params["b1"] = jax.random.normal(keys[i + 1], (1, hidden_dim), jnp.float32) * 0.01
    params["w2"] = jax.random.normal(keys[i + 2], (hidden_dim, hidden_dim), jnp.float32) * 0.05
    params["b2"] = jax.random.normal(keys[i + 3], (1, hidden_dim), jnp.float32) * 0.01
    params["w3"] = jax.random.normal(keys[i + 4], (hidden_dim, output_dim), jnp.float32) * 0.05
    params["b3"] = jax.random.normal(keys[i + 5], (1, output_dim), jnp.float32) * 0.01
    return params


def reference_forward(x, params, subset, use_bf16_matmul=True):
    """Pure-JAX reference with precision matched to the kernel path."""
    mdt = jnp.bfloat16 if use_bf16_matmul else jnp.float32

    def matmul(a, w):
        return jnp.dot(a.astype(mdt), w.astype(mdt), preferred_element_type=jnp.float32)

    w, b = params["input_heads"][subset]
    h = matmul(x, w) + b
    blocks = (
        (params["ln1_g"], params["ln1_b"], params["w1"], params["b1"]),
        (params["ln2_g"], params["ln2_b"], params["w2"], params["b2"]),
        (params["ln3_g"], params["ln3_b"], params["w3"], params["b3"]),
    )
    for idx, (g, be, ww, bb) in enumerate(blocks):
        mu = jnp.mean(h, axis=-1, keepdims=True)
        var = jnp.mean((h - mu) ** 2, axis=-1, keepdims=True)
        h = (h - mu) * jax.lax.rsqrt(var + LN_EPS) * g + be
        h = jnp.maximum(h, 0.0)
        if idx < 2:
            h = matmul(h, ww) + bb
        else:
            # final projection runs in f32 on the VPU inside the kernel
            h = jnp.dot(h, ww, precision=jax.lax.Precision.HIGHEST,
                        preferred_element_type=jnp.float32) + bb
    # kernel stores the output slab in mm_dtype (bf16 on the fast path)
    return h.astype(mdt).astype(jnp.float32)


if __name__ == "__main__":
    key = jax.random.PRNGKey(0)
    subset_dims = {"a": 64, "b": 96}      # two input heads with different input dims
    hidden = 128                          # demo-sized; production default is 512
    params = init_params(key, subset_dims, hidden_dim=hidden)

    batch = 200                           # deliberately not a multiple of 8*128 (tests padding)
    subset = "a"
    x = jax.random.normal(jax.random.PRNGKey(1), (batch, subset_dims[subset]), jnp.float32)

    out = jax.block_until_ready(mlp_forward(x, params, subset))
    ref = reference_forward(x, params, subset)

    assert out.shape == (batch, OUTPUT_DIM)
    max_err = float(jnp.max(jnp.abs(out - ref)))
    assert jnp.allclose(out, ref, atol=2e-3, rtol=2e-3), max_err

    print("KERNEL_OK")
</pallas_src>

<mosaic_0001>
module attributes {stable_mosaic.version = 11 : i64} {
  func.func @mlp_kernel(%arg0: i32, %arg1: memref<200x64xbf16, #tpu.memory_space<vmem>>, %arg2: memref<64x128xbf16, #tpu.memory_space<vmem>>, %arg3: memref<2x128x128xbf16, #tpu.memory_space<vmem>>, %arg4: memref<12x128xf32, #tpu.memory_space<vmem>>, %arg5: memref<200x128xbf16, #tpu.memory_space<vmem>>) attributes {dimension_semantics = [#tpu.dimension_semantics<parallel>], iteration_bounds = array<i64: 1>, scalar_prefetch = 0 : i64, scratch_operands = 0 : i64, tpu.core_type = #tpu.core_type<tc>, window_params = [{transform_indices = @transform_0, window_bounds = array<i64: 200, 64>}, {pipeline_mode = #tpu.pipeline_mode<synchronous>, transform_indices = @transform_1, window_bounds = array<i64: 64, 128>}, {pipeline_mode = #tpu.pipeline_mode<synchronous>, transform_indices = @transform_2, window_bounds = array<i64: 2, 128, 128>}, {pipeline_mode = #tpu.pipeline_mode<synchronous>, transform_indices = @transform_3, window_bounds = array<i64: 12, 128>}, {transform_indices = @transform_4, window_bounds = array<i64: 200, 128>}]} {
    %c0 = arith.constant 0 : index
    %c0_0 = arith.constant 0 : index
    %0 = vector.load %arg4[%c0, %c0_0] : memref<12x128xf32, #tpu.memory_space<vmem>>, vector<12x128xf32>
    %c0_1 = arith.constant 0 : index
    %c0_2 = arith.constant 0 : index
    %1 = vector.load %arg1[%c0_1, %c0_2] : memref<200x64xbf16, #tpu.memory_space<vmem>>, vector<200x64xbf16>
    %c0_3 = arith.constant 0 : index
    %c0_4 = arith.constant 0 : index
    %2 = vector.load %arg2[%c0_3, %c0_4] : memref<64x128xbf16, #tpu.memory_space<vmem>>, vector<64x128xbf16>
    %cst = arith.constant dense<0.000000e+00> : vector<200x128xf32>
    %3 = tpu.matmul %1, %2, %cst {dimension_numbers = #tpu.dot_dimension_numbers<[1], [0], [0], [1], [0, 0, 1, 1], [], []>} : vector<200x64xbf16>, vector<64x128xbf16>, vector<200x128xf32> -> vector<200x128xf32>
    %4 = vector.extract_strided_slice %0 {offsets = [0, 0], sizes = [1, 128], strides = [1, 1]} : vector<12x128xf32> to vector<1x128xf32>
    %5 = vector.broadcast %4 : vector<1x128xf32> to vector<200x128xf32>
    %6 = arith.addf %3, %5 : vector<200x128xf32>
    %7 = vector.extract_strided_slice %0 {offsets = [1, 0], sizes = [1, 128], strides = [1, 1]} : vector<12x128xf32> to vector<1x128xf32>
    %8 = vector.extract_strided_slice %0 {offsets = [2, 0], sizes = [1, 128], strides = [1, 1]} : vector<12x128xf32> to vector<1x128xf32>
    %cst_5 = arith.constant dense<0.000000e+00> : vector<200xf32>
    %9 = vector.multi_reduction <add>, %6, %cst_5 [1] : vector<200x128xf32> to vector<200xf32>
    %10 = vector.shape_cast %9 : vector<200xf32> to vector<200x1xf32>
    %cst_6 = arith.constant 1.280000e+02 : f32
    %11 = vector.broadcast %cst_6 : f32 to vector<200x1xf32>
    %12 = arith.divf %10, %11 : vector<200x1xf32>
    %13 = arith.mulf %6, %6 : vector<200x128xf32>
    %cst_7 = arith.constant dense<0.000000e+00> : vector<200xf32>
    %14 = vector.multi_reduction <add>, %13, %cst_7 [1] : vector<200x128xf32> to vector<200xf32>
    %15 = vector.shape_cast %14 : vector<200xf32> to vector<200x1xf32>
    %cst_8 = arith.constant 1.280000e+02 : f32
    %16 = vector.broadcast %cst_8 : f32 to vector<200x1xf32>
    %17 = arith.divf %15, %16 : vector<200x1xf32>
    %18 = arith.mulf %12, %12 : vector<200x1xf32>
    %19 = arith.subf %17, %18 : vector<200x1xf32>
    %cst_9 = arith.constant 0.000000e+00 : f32
    %20 = vector.broadcast %cst_9 : f32 to vector<200x1xf32>
    %21 = arith.maximumf %19, %20 : vector<200x1xf32>
    %22 = vector.broadcast %12 : vector<200x1xf32> to vector<200x128xf32>
    %23 = arith.subf %6, %22 : vector<200x128xf32>
    %cst_10 = arith.constant 9.99999974E-6 : f32
    %24 = vector.broadcast %cst_10 : f32 to vector<200x1xf32>
    %25 = arith.addf %21, %24 : vector<200x1xf32>
    %26 = math.rsqrt %25 : vector<200x1xf32>
    %27 = vector.broadcast %26 : vector<200x1xf32> to vector<200x128xf32>
    %28 = arith.mulf %23, %27 : vector<200x128xf32>
    %29 = vector.broadcast %7 : vector<1x128xf32> to vector<200x128xf32>
    %30 = arith.mulf %28, %29 : vector<200x128xf32>
    %31 = vector.broadcast %8 : vector<1x128xf32> to vector<200x128xf32>
    %32 = arith.addf %30, %31 : vector<200x128xf32>
    %cst_11 = arith.constant 0.000000e+00 : f32
    %33 = vector.broadcast %cst_11 : f32 to vector<200x128xf32>
    %34 = arith.maximumf %32, %33 : vector<200x128xf32>
    %c0_12 = arith.constant 0 : index
    %c0_13 = arith.constant 0 : index
    %c0_14 = arith.constant 0 : index
    %35 = vector.load %arg3[%c0_12, %c0_13, %c0_14] : memref<2x128x128xbf16, #tpu.memory_space<vmem>>, vector<1x128x128xbf16>
    %36 = vector.shape_cast %35 : vector<1x128x128xbf16> to vector<128x128xbf16>
    %37 = arith.truncf %34 : vector<200x128xf32> to vector<200x128xbf16>
    %cst_15 = arith.constant dense<0.000000e+00> : vector<200x128xf32>
    %38 = tpu.matmul %37, %36, %cst_15 {dimension_numbers = #tpu.dot_dimension_numbers<[1], [0], [0], [1], [0, 0, 1, 1], [], []>} : vector<200x128xbf16>, vector<128x128xbf16>, vector<200x128xf32> -> vector<200x128xf32>
    %39 = vector.extract_strided_slice %0 {offsets = [3, 0], sizes = [1, 128], strides = [1, 1]} : vector<12x128xf32> to vector<1x128xf32>
    %40 = vector.broadcast %39 : vector<1x128xf32> to vector<200x128xf32>
    %41 = arith.addf %38, %40 : vector<200x128xf32>
    %42 = vector.extract_strided_slice %0 {offsets = [4, 0], sizes = [1, 128], strides = [1, 1]} : vector<12x128xf32> to vector<1x128xf32>
    %43 = vector.extract_strided_slice %0 {offsets = [5, 0], sizes = [1, 128], strides = [1, 1]} : vector<12x128xf32> to vector<1x128xf32>
    %cst_16 = arith.constant dense<0.000000e+00> : vector<200xf32>
    %44 = vector.multi_reduction <add>, %41, %cst_16 [1] : vector<200x128xf32> to vector<200xf32>
    %45 = vector.shape_cast %44 : vector<200xf32> to vector<200x1xf32>
    %cst_17 = arith.constant 1.280000e+02 : f32
    %46 = vector.broadcast %cst_17 : f32 to vector<200x1xf32>
    %47 = arith.divf %45, %46 : vector<200x1xf32>
    %48 = arith.mulf %41, %41 : vector<200x128xf32>
    %cst_18 = arith.constant dense<0.000000e+00> : vector<200xf32>
    %49 = vector.multi_reduction <add>, %48, %cst_18 [1] : vector<200x128xf32> to vector<200xf32>
    %50 = vector.shape_cast %49 : vector<200xf32> to vector<200x1xf32>
    %cst_19 = arith.constant 1.280000e+02 : f32
    %51 = vector.broadcast %cst_19 : f32 to vector<200x1xf32>
    %52 = arith.divf %50, %51 : vector<200x1xf32>
    %53 = arith.mulf %47, %47 : vector<200x1xf32>
    %54 = arith.subf %52, %53 : vector<200x1xf32>
    %cst_20 = arith.constant 0.000000e+00 : f32
    %55 = vector.broadcast %cst_20 : f32 to vector<200x1xf32>
    %56 = arith.maximumf %54, %55 : vector<200x1xf32>
    %57 = vector.broadcast %47 : vector<200x1xf32> to vector<200x128xf32>
    %58 = arith.subf %41, %57 : vector<200x128xf32>
    %cst_21 = arith.constant 9.99999974E-6 : f32
    %59 = vector.broadcast %cst_21 : f32 to vector<200x1xf32>
    %60 = arith.addf %56, %59 : vector<200x1xf32>
    %61 = math.rsqrt %60 : vector<200x1xf32>
    %62 = vector.broadcast %61 : vector<200x1xf32> to vector<200x128xf32>
    %63 = arith.mulf %58, %62 : vector<200x128xf32>
    %64 = vector.broadcast %42 : vector<1x128xf32> to vector<200x128xf32>
    %65 = arith.mulf %63, %64 : vector<200x128xf32>
    %66 = vector.broadcast %43 : vector<1x128xf32> to vector<200x128xf32>
    %67 = arith.addf %65, %66 : vector<200x128xf32>
    %cst_22 = arith.constant 0.000000e+00 : f32
    %68 = vector.broadcast %cst_22 : f32 to vector<200x128xf32>
    %69 = arith.maximumf %67, %68 : vector<200x128xf32>
    %c1 = arith.constant 1 : index
    %c0_23 = arith.constant 0 : index
    %c0_24 = arith.constant 0 : index
    %70 = vector.load %arg3[%c1, %c0_23, %c0_24] : memref<2x128x128xbf16, #tpu.memory_space<vmem>>, vector<1x128x128xbf16>
    %71 = vector.shape_cast %70 : vector<1x128x128xbf16> to vector<128x128xbf16>
    %72 = arith.truncf %69 : vector<200x128xf32> to vector<200x128xbf16>
    %cst_25 = arith.constant dense<0.000000e+00> : vector<200x128xf32>
    %73 = tpu.matmul %72, %71, %cst_25 {dimension_numbers = #tpu.dot_dimension_numbers<[1], [0], [0], [1], [0, 0, 1, 1], [], []>} : vector<200x128xbf16>, vector<128x128xbf16>, vector<200x128xf32> -> vector<200x128xf32>
    %74 = vector.extract_strided_slice %0 {offsets = [6, 0], sizes = [1, 128], strides = [1, 1]} : vector<12x128xf32> to vector<1x128xf32>
    %75 = vector.broadcast %74 : vector<1x128xf32> to vector<200x128xf32>
    %76 = arith.addf %73, %75 : vector<200x128xf32>
    %77 = vector.extract_strided_slice %0 {offsets = [7, 0], sizes = [1, 128], strides = [1, 1]} : vector<12x128xf32> to vector<1x128xf32>
    %78 = vector.extract_strided_slice %0 {offsets = [8, 0], sizes = [1, 128], strides = [1, 1]} : vector<12x128xf32> to vector<1x128xf32>
    %cst_26 = arith.constant dense<0.000000e+00> : vector<200xf32>
    %79 = vector.multi_reduction <add>, %76, %cst_26 [1] : vector<200x128xf32> to vector<200xf32>
    %80 = vector.shape_cast %79 : vector<200xf32> to vector<200x1xf32>
    %cst_27 = arith.constant 1.280000e+02 : f32
    %81 = vector.broadcast %cst_27 : f32 to vector<200x1xf32>
    %82 = arith.divf %80, %81 : vector<200x1xf32>
    %83 = arith.mulf %76, %76 : vector<200x128xf32>
    %cst_28 = arith.constant dense<0.000000e+00> : vector<200xf32>
    %84 = vector.multi_reduction <add>, %83, %cst_28 [1] : vector<200x128xf32> to vector<200xf32>
    %85 = vector.shape_cast %84 : vector<200xf32> to vector<200x1xf32>
    %cst_29 = arith.constant 1.280000e+02 : f32
    %86 = vector.broadcast %cst_29 : f32 to vector<200x1xf32>
    %87 = arith.divf %85, %86 : vector<200x1xf32>
    %88 = arith.mulf %82, %82 : vector<200x1xf32>
    %89 = arith.subf %87, %88 : vector<200x1xf32>
    %cst_30 = arith.constant 0.000000e+00 : f32
    %90 = vector.broadcast %cst_30 : f32 to vector<200x1xf32>
    %91 = arith.maximumf %89, %90 : vector<200x1xf32>
    %92 = vector.broadcast %82 : vector<200x1xf32> to vector<200x128xf32>
    %93 = arith.subf %76, %92 : vector<200x128xf32>
    %cst_31 = arith.constant 9.99999974E-6 : f32
    %94 = vector.broadcast %cst_31 : f32 to vector<200x1xf32>
    %95 = arith.addf %91, %94 : vector<200x1xf32>
    %96 = math.rsqrt %95 : vector<200x1xf32>
    %97 = vector.broadcast %96 : vector<200x1xf32> to vector<200x128xf32>
    %98 = arith.mulf %93, %97 : vector<200x128xf32>
    %99 = vector.broadcast %77 : vector<1x128xf32> to vector<200x128xf32>
    %100 = arith.mulf %98, %99 : vector<200x128xf32>
    %101 = vector.broadcast %78 : vector<1x128xf32> to vector<200x128xf32>
    %102 = arith.addf %100, %101 : vector<200x128xf32>
    %cst_32 = arith.constant 0.000000e+00 : f32
    %103 = vector.broadcast %cst_32 : f32 to vector<200x128xf32>
    %104 = arith.maximumf %102, %103 : vector<200x128xf32>
    %105 = vector.extract_strided_slice %0 {offsets = [10, 0], sizes = [1, 128], strides = [1, 1]} : vector<12x128xf32> to vector<1x128xf32>
    %106 = vector.broadcast %105 : vector<1x128xf32> to vector<200x128xf32>
    %107 = arith.mulf %104, %106 : vector<200x128xf32>
    %cst_33 = arith.constant dense<0.000000e+00> : vector<200xf32>
    %108 = vector.multi_reduction <add>, %107, %cst_33 [1] : vector<200x128xf32> to vector<200xf32>
    %109 = vector.shape_cast %108 : vector<200xf32> to vector<200x1xf32>
    %110 = vector.extract_strided_slice %0 {offsets = [11, 0], sizes = [1, 128], strides = [1, 1]} : vector<12x128xf32> to vector<1x128xf32>
    %111 = vector.broadcast %110 : vector<1x128xf32> to vector<200x128xf32>
    %112 = arith.mulf %104, %111 : vector<200x128xf32>
    %cst_34 = arith.constant dense<0.000000e+00> : vector<200xf32>
    %113 = vector.multi_reduction <add>, %112, %cst_34 [1] : vector<200x128xf32> to vector<200xf32>
    %114 = vector.shape_cast %113 : vector<200xf32> to vector<200x1xf32>
    %115 = tpu.iota {dimensions = array<i32: 1>} : vector<1x128xi32>
    %c0_i32 = arith.constant 0 : i32
    %116 = vector.broadcast %c0_i32 : i32 to vector<1x128xi32>
    %117 = arith.cmpi eq, %115, %116 : vector<1x128xi32>
    %c1_i32 = arith.constant 1 : i32
    %118 = vector.broadcast %c1_i32 : i32 to vector<1x128xi32>
    %119 = arith.cmpi eq, %115, %118 : vector<1x128xi32>
    %cst_35 = arith.constant 0.000000e+00 : f32
    %120 = vector.shape_cast %119 : vector<1x128xi1> to vector<1x128xi1>
    %121 = vector.broadcast %120 : vector<1x128xi1> to vector<200x128xi1>
    %122 = vector.shape_cast %114 : vector<200x1xf32> to vector<200x1xf32>
    %123 = vector.broadcast %122 : vector<200x1xf32> to vector<200x128xf32>
    %124 = vector.broadcast %cst_35 : f32 to vector<200x128xf32>
    %125 = arith.select %121, %123, %124 : vector<200x128xi1>, vector<200x128xf32>
    %126 = vector.shape_cast %117 : vector<1x128xi1> to vector<1x128xi1>
    %127 = vector.broadcast %126 : vector<1x128xi1> to vector<200x128xi1>
    %128 = vector.shape_cast %109 : vector<200x1xf32> to vector<200x1xf32>
    %129 = vector.broadcast %128 : vector<200x1xf32> to vector<200x128xf32>
    %130 = arith.select %127, %129, %125 : vector<200x128xi1>, vector<200x128xf32>
    %131 = vector.extract_strided_slice %0 {offsets = [9, 0], sizes = [1, 128], strides = [1, 1]} : vector<12x128xf32> to vector<1x128xf32>
    %132 = vector.broadcast %131 : vector<1x128xf32> to vector<200x128xf32>
    %133 = arith.addf %130, %132 : vector<200x128xf32>
    %134 = arith.truncf %133 : vector<200x128xf32> to vector<200x128xbf16>
    %c0_36 = arith.constant 0 : index
    %c0_37 = arith.constant 0 : index
    %135 = vector.load %arg5[%c0_36, %c0_37] : memref<200x128xbf16, #tpu.memory_space<vmem>>, vector<200x128xbf16>
    tpu.vector_store %arg5[%c0_36, %c0_37], %134 {strides = array<i32>} : memref<200x128xbf16, #tpu.memory_space<vmem>>, vector<200x128xbf16>,
    return
  }
  func.func @transform_0(%arg0: i32) -> (i32, i32) {
    %c0_i32 = arith.constant 0 : i32
    %c0_i32_0 = arith.constant 0 : i32
    return %arg0, %c0_i32 : i32, i32
  }
  func.func @transform_1(%arg0: i32) -> (i32, i32) {
    %c0_i32 = arith.constant 0 : i32
    %c0_i32_0 = arith.constant 0 : i32
    %c0_i32_1 = arith.constant 0 : i32
    return %c0_i32, %c0_i32_0 : i32, i32
  }
  func.func @transform_2(%arg0: i32) -> (i32, i32, i32) {
    %c0_i32 = arith.constant 0 : i32
    %c0_i32_0 = arith.constant 0 : i32
    %c0_i32_1 = arith.constant 0 : i32
    %c0_i32_2 = arith.constant 0 : i32
    return %c0_i32, %c0_i32_0, %c0_i32_1 : i32, i32, i32
  }
  func.func @transform_3(%arg0: i32) -> (i32, i32) {
    %c0_i32 = arith.constant 0 : i32
    %c0_i32_0 = arith.constant 0 : i32
    %c0_i32_1 = arith.constant 0 : i32
    return %c0_i32, %c0_i32_0 : i32, i32
  }
  func.func @transform_4(%arg0: i32) -> (i32, i32) {
    %c0_i32 = arith.constant 0 : i32
    %c0_i32_0 = arith.constant 0 : i32
    return %arg0, %c0_i32 : i32, i32
  }
}

</mosaic_0001>

<llo_original>
// kernel: mlp_forward.1
$region0: #{mlp_forward.1}
  #allocation0 [shape = 'u32[]', space=smem, size = 0x4, offset = 0x4, fixed_abs, tag = 'smem constant byte address 0x4 - core index']
  #allocation1 [shape = 'u32[144,128]{1,0:T(1,128)}', space=vmem, size = 0x12000, scoped, tag = 'internal scratch']
  %s0 = inlined_call_operand.vmem [shape: bf16[200,64], index: 0, kind: input, shape index: {}]
  %s1 = inlined_call_operand.vmem [shape: bf16[64,128], index: 1, kind: input, shape index: {}]
  %s2 = inlined_call_operand.vmem [shape: bf16[2,128,128], index: 2, kind: input, shape index: {}]
  %s3 = inlined_call_operand.vmem [shape: f32[12,128], index: 3, kind: input, shape index: {}]
  %s4 = inlined_call_operand.vmem [shape: bf16[200,128], index: 4, kind: output, shape index: {}]
  %s5 = sld [smem:[#allocation0]]
  $region26: #{mlp_forward.1} parent=0
    _
  %s7 = ssub.s32 1, %s5
  %s8 = scalar_select 0, %s7, %s5
  // Predicated region
  $region2: #{mlp_forward.1} parent=0 // pred_check
    _
  $region3: #{mlp_forward.1} parent=0 // pred_check_branch
    %10 = sbr.rel (0) target = $region5
  $region4: #{mlp_forward.1} parent=0 // pred_region
    _
  $region5: #{mlp_forward.1} parent=0 // pred_fallthru
    _
  // Predicated region
  $region6: #{mlp_forward.1} parent=0 // pred_check
    _
  $region7: #{mlp_forward.1} parent=0 // pred_check_branch
    %12 = sbr.rel (0) target = $region9
  $region8: #{mlp_forward.1} parent=0 // pred_region
    _
  $region9: #{mlp_forward.1} parent=0 // pred_fallthru
    _
  // Predicated region
  $region10: #{mlp_forward.1} parent=0 // pred_check
    _
  $region11: #{mlp_forward.1} parent=0 // pred_check_branch
    %14 = sbr.rel (0) target = $region13
  $region12: #{mlp_forward.1} parent=0 // pred_region
    _
  $region13: #{mlp_forward.1} parent=0 // pred_fallthru
    _
  // Predicated region
  $region14: #{mlp_forward.1} parent=0 // pred_check
    _
  $region15: #{mlp_forward.1} parent=0 // pred_check_branch
    %16 = sbr.rel (0) target = $region17
  $region16: #{mlp_forward.1} parent=0 // pred_region
    _
  $region17: #{mlp_forward.1} parent=0 // pred_fallthru
    _
  %v18 = vld [vmem:[%s3] sm:$0xff]
  %v19 = vld [vmem:[%s3 + $0x8] sm:$0xf]
  %v20 = vld [vmem:[%s0] sm:$0xf]
  %v21 = vld [vmem:[%s0 + $0x4] sm:$0xf]
  %v22 = vld [vmem:[%s0 + $0x8] sm:$0xf]
  %v23 = vld [vmem:[%s0 + $0xc] sm:$0xf]
  %v24 = vld [vmem:[%s0 + $0x10] sm:$0xf]
  %v25 = vld [vmem:[%s0 + $0x14] sm:$0xf]
  %v26 = vld [vmem:[%s0 + $0x18] sm:$0xf]
  %v27 = vld [vmem:[%s0 + $0x1c] sm:$0xf]
  %v28 = vld [vmem:[%s0 + $0x20] sm:$0xf]
  %v29 = vld [vmem:[%s0 + $0x24] sm:$0xf]
  %v30 = vld [vmem:[%s0 + $0x28] sm:$0xf]
  %v31 = vld [vmem:[%s0 + $0x2c] sm:$0xf]
  %v32 = vld [vmem:[%s0 + $0x30] sm:$0xf]
  %v33 = vld [vmem:[%s0 + $0x34] sm:$0xf]
  %v34 = vld [vmem:[%s0 + $0x38] sm:$0xf]
  %v35 = vld [vmem:[%s0 + $0x3c] sm:$0xf]
  %v36 = vld [vmem:[%s0 + $0x40] sm:$0xf]
  %v37 = vld [vmem:[%s0 + $0x44] sm:$0xf]
  %v38 = vld [vmem:[%s0 + $0x48] sm:$0xf]
  %v39 = vld [vmem:[%s0 + $0x4c] sm:$0xf]
  %v40 = vld [vmem:[%s0 + $0x50] sm:$0xf]
  %v41 = vld [vmem:[%s0 + $0x54] sm:$0xf]
  %v42 = vld [vmem:[%s0 + $0x58] sm:$0xf]
  %v43 = vld [vmem:[%s0 + $0x5c] sm:$0xf]
  %v44 = vld [vmem:[%s0 + $0x60] sm:$0xf]
  %v45 = vld [vmem:[%s1] sm:$0xf]
  %v46 = vld [vmem:[%s1 + $0x4] sm:$0xf]
  %v47 = vld [vmem:[%s1 + $0x8] sm:$0xf]
  %v48 = vld [vmem:[%s1 + $0xc] sm:$0xf]
  %v49 = vld [vmem:[%s1 + $0x10] sm:$0xf]
  %v50 = vld [vmem:[%s1 + $0x14] sm:$0xf]
  %v51 = vld [vmem:[%s1 + $0x18] sm:$0xf]
  %v52 = vld [vmem:[%s1 + $0x1c] sm:$0xf]
  %v53 = vlaneseq
  %v54 = vshrl.u32 %v53, 7
  %v55 = vsub.s32 0, %v54
  %v56 = vrot.slane %v18, %v55
  %v82 = vunpack.c.l.b16 %v20
  %v83 = vunpack.c.l.b16 %v21
  %v84 = vunpack.c.l.b16 %v22
  %v85 = vunpack.c.l.b16 %v23
  %v86 = vunpack.c.l.b16 %v24
  %v87 = vunpack.c.l.b16 %v25
  %v88 = vunpack.c.l.b16 %v26
  %v89 = vunpack.c.l.b16 %v27
  %v90 = vunpack.c.l.b16 %v28
  %v91 = vunpack.c.l.b16 %v29
  %v92 = vunpack.c.l.b16 %v30
  %v93 = vunpack.c.l.b16 %v31
  %v94 = vunpack.c.l.b16 %v32
  %v95 = vunpack.c.l.b16 %v33
  %v96 = vunpack.c.l.b16 %v34
  %v97 = vunpack.c.l.b16 %v35
  %v98 = vunpack.c.l.b16 %v36
  %v99 = vunpack.c.l.b16 %v37
  %v100 = vunpack.c.l.b16 %v38
  %v101 = vunpack.c.l.b16 %v39
  %v102 = vunpack.c.l.b16 %v40
  %v103 = vunpack.c.l.b16 %v41
  %v104 = vunpack.c.l.b16 %v42
  %v105 = vunpack.c.l.b16 %v43
  %v106 = vunpack.c.l.b16 %v44
  %v107 = vpack.c.b16 %v83, %v82
  %v108 = vpack.c.b16 %v85, %v84
  %v109 = vpack.c.b16 %v87, %v86
  %v110 = vpack.c.b16 %v89, %v88
  %v111 = vpack.c.b16 %v91, %v90
  %v112 = vpack.c.b16 %v93, %v92
  %v113 = vpack.c.b16 %v95, %v94
  %v114 = vpack.c.b16 %v97, %v96
  %v115 = vpack.c.b16 %v99, %v98
  %v116 = vpack.c.b16 %v101, %v100
  %v117 = vpack.c.b16 %v103, %v102
  %v118 = vpack.c.b16 %v105, %v104
  %v119 = vpack.c.b16 %v106, %v106
  %v128 = vunpack.c.l.b16 %v45
  %v129 = vunpack.c.l.b16 %v46
  %v130 = vunpack.c.l.b16 %v47
  %v131 = vunpack.c.l.b16 %v48
  %v132 = vunpack.c.l.b16 %v49
  %v133 = vunpack.c.l.b16 %v50
  %v134 = vunpack.c.l.b16 %v51
  %v135 = vunpack.c.l.b16 %v52
  %v136 = vpack.c.b16 %v129, %v128
  %v137 = vpack.c.b16 %v131, %v130
  %v138 = vpack.c.b16 %v133, %v132
  %v139 = vpack.c.b16 %v135, %v134
  %vm144 = vcmask 523264
  %v146 = vsel %vm144, %v107, 0
  %v149 = vsel %vm144, %v108, 0
  %v152 = vsel %vm144, %v109, 0
  %v155 = vsel %vm144, %v110, 0
  %v158 = vsel %vm144, %v111, 0
  %v161 = vsel %vm144, %v112, 0
  %v164 = vsel %vm144, %v113, 0
  %v167 = vsel %vm144, %v114, 0
  %v170 = vsel %vm144, %v115, 0
  %v173 = vsel %vm144, %v116, 0
  %v176 = vsel %vm144, %v117, 0
  %v179 = vsel %vm144, %v118, 0
  %v182 = vsel %vm144, %v119, 0
  %184 = vmatprep.subr.bf16.mxu0 0
  %185 = vmatpush1.bf16.msra.mxu0 %v136
  %186 = vmatprep.subr.bf16.mxu0 0
  %187 = vmatpush1.bf16.msra.mxu0 %v137
  %188 = vmatprep.subr.bf16.mxu0 0
  %189 = vmatpush1.bf16.msra.mxu0 %v138
  %190 = vmatprep.subr.bf16.mxu0 0
  %191 = vmatpush1.bf16.msra.mxu0 %v139
  %192 = vmatprep.subr.bf16.mxu0 0
  %193 = vmatpush1.bf16.msra.mxu0 0
  %194 = vmatprep.subr.bf16.mxu0 0
  %195 = vmatpush1.bf16.msra.mxu0 0
  %196 = vmatprep.subr.bf16.mxu0 0
  %197 = vmatpush1.bf16.msra.mxu0 0
  %198 = vmatprep.subr.bf16.mxu0 0
  %199 = vmatpush1.bf16.msra.mxu0 0
  %200 = vmatprep.subr.bf16.mxu0 0
  %201 = vmatpush1.bf16.msra.mxu0 0
  %202 = vmatprep.subr.bf16.mxu0 0
  %203 = vmatpush1.bf16.msra.mxu0 0
  %204 = vmatprep.subr.bf16.mxu0 0
  %205 = vmatpush1.bf16.msra.mxu0 0
  %206 = vmatprep.subr.bf16.mxu0 0
  %207 = vmatpush1.bf16.msra.mxu0 0
  %208 = vmatprep.subr.bf16.mxu0 0
  %209 = vmatpush1.bf16.msra.mxu0 0
  %210 = vmatprep.subr.bf16.mxu0 0
  %211 = vmatpush1.bf16.msra.mxu0 0
  %212 = vmatprep.subr.bf16.mxu0 0
  %213 = vmatpush1.bf16.msra.mxu0 0
  %214 = vmatprep.subr.bf16.mxu0 0
  %215 = vmatpush1.bf16.msra.mxu0 0
  %216 = vmatprep.mubr.bf16.mxu0 0
  %217 = vmatmul.mubr.bf16.gmra.mrb[0].mxu0 %v146
  %v218 = vpop.f32.mrb[0].mxu0
  %v219 = vadd.f32 %v56, %v218
  %v220 = vpop.f32.mrb[0].mxu0
  %v221 = vpop.f32.mrb[0].mxu0
  %v222 = vadd.f32 %v56, %v221
  %v223 = vpop.f32.mrb[0].mxu0
  %224 = vmatprep.mubr.bf16.mxu0 0
  %225 = vmatmul.mubr.bf16.gmra.mrb[0].mxu0 %v149
  %v226 = vpop.f32.mrb[0].mxu0
  %v227 = vadd.f32 %v56, %v226
  %v228 = vpop.f32.mrb[0].mxu0
  %v229 = vpop.f32.mrb[0].mxu0
  %v230 = vadd.f32 %v56, %v229
  %v231 = vpop.f32.mrb[0].mxu0
  %232 = vmatprep.mubr.bf16.mxu0 0
  %233 = vmatmul.mubr.bf16.gmra.mrb[0].mxu0 %v152
  %v234 = vpop.f32.mrb[0].mxu0
  %v235 = vadd.f32 %v56, %v234
  %v236 = vpop.f32.mrb[0].mxu0
  %v237 = vpop.f32.mrb[0].mxu0
  %v238 = vadd.f32 %v56, %v237
  %v239 = vpop.f32.mrb[0].mxu0
  %240 = vmatprep.mubr.bf16.mxu0 0
  %241 = vmatmul.mubr.bf16.gmra.mrb[0].mxu0 %v155
  %v242 = vpop.f32.mrb[0].mxu0
  %v243 = vadd.f32 %v56, %v242
  %v244 = vpop.f32.mrb[0].mxu0
  %v245 = vpop.f32.mrb[0].mxu0
  %v246 = vadd.f32 %v56, %v245
  %v247 = vpop.f32.mrb[0].mxu0
  %248 = vmatprep.mubr.bf16.mxu0 0
  %249 = vmatmul.mubr.bf16.gmra.mrb[0].mxu0 %v158
  %v250 = vpop.f32.mrb[0].mxu0
  %v251 = vadd.f32 %v56, %v250
  %v252 = vpop.f32.mrb[0].mxu0
  %v253 = vpop.f32.mrb[0].mxu0
  %v254 = vadd.f32 %v56, %v253
  %v255 = vpop.f32.mrb[0].mxu0
  %256 = vmatprep.mubr.bf16.mxu0 0
  %257 = vmatmul.mubr.bf16.gmra.mrb[0].mxu0 %v161
  %v258 = vpop.f32.mrb[0].mxu0
  %v259 = vadd.f32 %v56, %v258
  %v260 = vpop.f32.mrb[0].mxu0
  %v261 = vpop.f32.mrb[0].mxu0
  %v262 = vadd.f32 %v56, %v261
  %v263 = vpop.f32.mrb[0].mxu0
  %264 = vmatprep.mubr.bf16.mxu0 0
  %265 = vmatmul.mubr.bf16.gmra.mrb[0].mxu0 %v164
  %v266 = vpop.f32.mrb[0].mxu0
  %v267 = vadd.f32 %v56, %v266
  %v268 = vpop.f32.mrb[0].mxu0
  %v269 = vpop.f32.mrb[0].mxu0
  %v270 = vadd.f32 %v56, %v269
  %v271 = vpop.f32.mrb[0].mxu0
  %272 = vmatprep.mubr.bf16.mxu0 0
  %273 = vmatmul.mubr.bf16.gmra.mrb[0].mxu0 %v167
  %v274 = vpop.f32.mrb[0].mxu0
  %v275 = vadd.f32 %v56, %v274
  %v276 = vpop.f32.mrb[0].mxu0
  %v277 = vpop.f32.mrb[0].mxu0
  %v278 = vadd.f32 %v56, %v277
  %v279 = vpop.f32.mrb[0].mxu0
  %280 = vmatprep.mubr.bf16.mxu0 0
  %281 = vmatmul.mubr.bf16.gmra.mrb[0].mxu0 %v170
  %v282 = vpop.f32.mrb[0].mxu0
  %v283 = vadd.f32 %v56, %v282
  %v284 = vpop.f32.mrb[0].mxu0
  %v285 = vpop.f32.mrb[0].mxu0
  %v286 = vadd.f32 %v56, %v285
  %v287 = vpop.f32.mrb[0].mxu0
  %288 = vmatprep.mubr.bf16.mxu0 0
  %289 = vmatmul.mubr.bf16.gmra.mrb[0].mxu0 %v173
  %v290 = vpop.f32.mrb[0].mxu0
  %v291 = vadd.f32 %v56, %v290
  %v292 = vpop.f32.mrb[0].mxu0
  %v293 = vpop.f32.mrb[0].mxu0
  %v294 = vadd.f32 %v56, %v293
  %v295 = vpop.f32.mrb[0].mxu0
  %296 = vmatprep.mubr.bf16.mxu0 0
  %297 = vmatmul.mubr.bf16.gmra.mrb[0].mxu0 %v176
  %v298 = vpop.f32.mrb[0].mxu0
  %v299 = vadd.f32 %v56, %v298
  %v300 = vpop.f32.mrb[0].mxu0
  %v301 = vpop.f32.mrb[0].mxu0
  %v302 = vadd.f32 %v56, %v301
  %v303 = vpop.f32.mrb[0].mxu0
  %304 = vmatprep.mubr.bf16.mxu0 0
  %305 = vmatmul.mubr.bf16.gmra.mrb[0].mxu0 %v179
  %v306 = vpop.f32.mrb[0].mxu0
  %v307 = vadd.f32 %v56, %v306
  %v308 = vpop.f32.mrb[0].mxu0
  %v309 = vpop.f32.mrb[0].mxu0
  %v310 = vadd.f32 %v56, %v309
  %v311 = vpop.f32.mrb[0].mxu0
  %312 = vmatprep.mubr.bf16.mxu0 0
  %313 = vmatmul.mubr.bf16.gmra.mrb[0].mxu0 %v182
  %v314 = vpop.f32.mrb[0].mxu0
  %v315 = vadd.f32 %v56, %v314
  %v316 = vpop.f32.mrb[0].mxu0
  %v317 = vpop.f32.mrb[0].mxu0
  %v318 = vpop.f32.mrb[0].mxu0
  %319 = vdwg.mxu0
  %320 = vadd.xlane.f32.xlu0 %v219
  %v321 = vpop.xlane.xlu0 %320
  %322 = vadd.xlane.f32.xlu0 %v222
  %v323 = vpop.xlane.xlu0 %322
  %324 = vadd.xlane.f32.xlu0 %v227
  %v325 = vpop.xlane.xlu0 %324
  %326 = vadd.xlane.f32.xlu0 %v230
  %v327 = vpop.xlane.xlu0 %326
  %328 = vadd.xlane.f32.xlu0 %v235
  %v329 = vpop.xlane.xlu0 %328
  %330 = vadd.xlane.f32.xlu0 %v238
  %v331 = vpop.xlane.xlu0 %330
  %332 = vadd.xlane.f32.xlu0 %v243
  %v333 = vpop.xlane.xlu0 %332
  %334 = vadd.xlane.f32.xlu0 %v246
  %v335 = vpop.xlane.xlu0 %334
  %336 = vadd.xlane.f32.xlu0 %v251
  %v337 = vpop.xlane.xlu0 %336
  %338 = vadd.xlane.f32.xlu0 %v254
  %v339 = vpop.xlane.xlu0 %338
  %340 = vadd.xlane.f32.xlu0 %v259
  %v341 = vpop.xlane.xlu0 %340
  %342 = vadd.xlane.f32.xlu0 %v262
  %v343 = vpop.xlane.xlu0 %342
  %344 = vadd.xlane.f32.xlu0 %v267
  %v345 = vpop.xlane.xlu0 %344
  %346 = vadd.xlane.f32.xlu0 %v270
  %v347 = vpop.xlane.xlu0 %346
  %348 = vadd.xlane.f32.xlu0 %v275
  %v349 = vpop.xlane.xlu0 %348
  %350 = vadd.xlane.f32.xlu0 %v278
  %v351 = vpop.xlane.xlu0 %350
  %352 = vadd.xlane.f32.xlu0 %v283
  %v353 = vpop.xlane.xlu0 %352
  %354 = vadd.xlane.f32.xlu0 %v286
  %v355 = vpop.xlane.xlu0 %354
  %356 = vadd.xlane.f32.xlu0 %v291
  %v357 = vpop.xlane.xlu0 %356
  %358 = vadd.xlane.f32.xlu0 %v294
  %v359 = vpop.xlane.xlu0 %358
  %360 = vadd.xlane.f32.xlu0 %v299
  %v361 = vpop.xlane.xlu0 %360
  %362 = vadd.xlane.f32.xlu0 %v302
  %v363 = vpop.xlane.xlu0 %362
  %364 = vadd.xlane.f32.xlu0 %v307
  %v365 = vpop.xlane.xlu0 %364
  %366 = vadd.xlane.f32.xlu0 %v310
  %v367 = vpop.xlane.xlu0 %366
  %368 = vadd.xlane.f32.xlu0 %v315
  %v369 = vpop.xlane.xlu0 %368
  %v370 = vrcp.pop 128.0
  %v371 = vmul.f32 %v321, %v370
  %v372 = vmul.f32 %v323, %v370
  %v373 = vmul.f32 %v325, %v370
  %v374 = vmul.f32 %v327, %v370
  %v375 = vmul.f32 %v329, %v370
  %v376 = vmul.f32 %v331, %v370
  %v377 = vmul.f32 %v333, %v370
  %v378 = vmul.f32 %v335, %v370
  %v379 = vmul.f32 %v337, %v370
  %v380 = vmul.f32 %v339, %v370
  %v381 = vmul.f32 %v341, %v370
  %v382 = vmul.f32 %v343, %v370
  %v383 = vmul.f32 %v345, %v370
  %v384 = vmul.f32 %v347, %v370
  %v385 = vmul.f32 %v349, %v370
  %v386 = vmul.f32 %v351, %v370
  %v387 = vmul.f32 %v353, %v370
  %v388 = vmul.f32 %v355, %v370
  %v389 = vmul.f32 %v357, %v370
  %v390 = vmul.f32 %v359, %v370
  %v391 = vmul.f32 %v361, %v370
  %v392 = vmul.f32 %v363, %v370
  %v393 = vmul.f32 %v365, %v370
  %v394 = vmul.f32 %v367, %v370
  %v395 = vmul.f32 %v369, %v370
  %v396 = vmul.f32 %v219, %v219
  %v397 = vmul.f32 %v222, %v222
  %v398 = vmul.f32 %v227, %v227
  %v399 = vmul.f32 %v230, %v230
  %v400 = vmul.f32 %v235, %v235
  %v401 = vmul.f32 %v238, %v238
  %v402 = vmul.f32 %v243, %v243
  %v403 = vmul.f32 %v246, %v246
  %v404 = vmul.f32 %v251, %v251
  %v405 = vmul.f32 %v254, %v254
  %v406 = vmul.f32 %v259, %v259
  %v407 = vmul.f32 %v262, %v262
  %v408 = vmul.f32 %v267, %v267
  %v409 = vmul.f32 %v270, %v270
  %v410 = vmul.f32 %v275, %v275
  %v411 = vmul.f32 %v278, %v278
  %v412 = vmul.f32 %v283, %v283
  %v413 = vmul.f32 %v286, %v286
  %v414 = vmul.f32 %v291, %v291
  %v415 = vmul.f32 %v294, %v294
  %v416 = vmul.f32 %v299, %v299
  %v417 = vmul.f32 %v302, %v302
  %v418 = vmul.f32 %v307, %v307
  %v419 = vmul.f32 %v310, %v310
  %v420 = vmul.f32 %v315, %v315
  %421 = vadd.xlane.f32.xlu0 %v396
  %v422 = vpop.xlane.xlu0 %421
  %423 = vadd.xlane.f32.xlu0 %v397
  %v424 = vpop.xlane.xlu0 %423
  %425 = vadd.xlane.f32.xlu0 %v398
  %v426 = vpop.xlane.xlu0 %425
  %427 = vadd.xlane.f32.xlu0 %v399
  %v428 = vpop.xlane.xlu0 %427
  %429 = vadd.xlane.f32.xlu0 %v400
  %v430 = vpop.xlane.xlu0 %429
  %431 = vadd.xlane.f32.xlu0 %v401
  %v432 = vpop.xlane.xlu0 %431
  %433 = vadd.xlane.f32.xlu0 %v402
  %v434 = vpop.xlane.xlu0 %433
  %435 = vadd.xlane.f32.xlu0 %v403
  %v436 = vpop.xlane.xlu0 %435
  %437 = vadd.xlane.f32.xlu0 %v404
  %v438 = vpop.xlane.xlu0 %437
  %439 = vadd.xlane.f32.xlu0 %v405
  %v440 = vpop.xlane.xlu0 %439
  %441 = vadd.xlane.f32.xlu0 %v406
  %v442 = vpop.xlane.xlu0 %441
  %443 = vadd.xlane.f32.xlu0 %v407
  %v444 = vpop.xlane.xlu0 %443
  %445 = vadd.xlane.f32.xlu0 %v408
  %v446 = vpop.xlane.xlu0 %445
  %447 = vadd.xlane.f32.xlu0 %v409
  %v448 = vpop.xlane.xlu0 %447
  %449 = vadd.xlane.f32.xlu0 %v410
  %v450 = vpop.xlane.xlu0 %449
  %451 = vadd.xlane.f32.xlu0 %v411
  %v452 = vpop.xlane.xlu0 %451
  %453 = vadd.xlane.f32.xlu0 %v412
  %v454 = vpop.xlane.xlu0 %453
  %455 = vadd.xlane.f32.xlu0 %v413
  %v456 = vpop.xlane.xlu0 %455
  %457 = vadd.xlane.f32.xlu0 %v414
  %v458 = vpop.xlane.xlu0 %457
  %459 = vadd.xlane.f32.xlu0 %v415
  %v460 = vpop.xlane.xlu0 %459
  %461 = vadd.xlane.f32.xlu0 %v416
  %v462 = vpop.xlane.xlu0 %461
  %463 = vadd.xlane.f32.xlu0 %v417
  %v464 = vpop.xlane.xlu0 %463
  %465 = vadd.xlane.f32.xlu0 %v418
  %v466 = vpop.xlane.xlu0 %465
  %467 = vadd.xlane.f32.xlu0 %v419
  %v468 = vpop.xlane.xlu0 %467
  %469 = vadd.xlane.f32.xlu0 %v420
  %v470 = vpop.xlane.xlu0 %469
  %v471 = vmul.f32 %v422, %v370
  %v472 = vmul.f32 %v424, %v370
  %v473 = vmul.f32 %v426, %v370
  %v474 = vmul.f32 %v428, %v370
  %v475 = vmul.f32 %v430, %v370
  %v476 = vmul.f32 %v432, %v370
  %v477 = vmul.f32 %v434, %v370
  %v478 = vmul.f32 %v436, %v370
  %v479 = vmul.f32 %v438, %v370
  %v480 = vmul.f32 %v440, %v370
  %v481 = vmul.f32 %v442, %v370
  %v482 = vmul.f32 %v444, %v370
  %v483 = vmul.f32 %v446, %v370
  %v484 = vmul.f32 %v448, %v370
  %v485 = vmul.f32 %v450, %v370
  %v486 = vmul.f32 %v452, %v370
  %v487 = vmul.f32 %v454, %v370
  %v488 = vmul.f32 %v456, %v370
  %v489 = vmul.f32 %v458, %v370
  %v490 = vmul.f32 %v460, %v370
  %v491 = vmul.f32 %v462, %v370
  %v492 = vmul.f32 %v464, %v370
  %v493 = vmul.f32 %v466, %v370
  %v494 = vmul.f32 %v468, %v370
  %v495 = vmul.f32 %v470, %v370
  %v496 = vmul.f32 %v371, %v371
  %v497 = vmul.f32 %v372, %v372
  %v498 = vmul.f32 %v373, %v373
  %v499 = vmul.f32 %v374, %v374
  %v500 = vmul.f32 %v375, %v375
  %v501 = vmul.f32 %v376, %v376
  %v502 = vmul.f32 %v377, %v377
  %v503 = vmul.f32 %v378, %v378
  %v504 = vmul.f32 %v379, %v379
  %v505 = vmul.f32 %v380, %v380
  %v506 = vmul.f32 %v381, %v381
  %v507 = vmul.f32 %v382, %v382
  %v508 = vmul.f32 %v383, %v383
  %v509 = vmul.f32 %v384, %v384
  %v510 = vmul.f32 %v385, %v385
  %v511 = vmul.f32 %v386, %v386
  %v512 = vmul.f32 %v387, %v387
  %v513 = vmul.f32 %v388, %v388
  %v514 = vmul.f32 %v389, %v389
  %v515 = vmul.f32 %v390, %v390
  %v516 = vmul.f32 %v391, %v391
  %v517 = vmul.f32 %v392, %v392
  %v518 = vmul.f32 %v393, %v393
  %v519 = vmul.f32 %v394, %v394
  %v520 = vmul.f32 %v395, %v395
  %v521 = vsub.f32 %v471, %v496
  %v522 = vsub.f32 %v472, %v497
  %v523 = vsub.f32 %v473, %v498
  %v524 = vsub.f32 %v474, %v499
  %v525 = vsub.f32 %v475, %v500
  %v526 = vsub.f32 %v476, %v501
  %v527 = vsub.f32 %v477, %v502
  %v528 = vsub.f32 %v478, %v503
  %v529 = vsub.f32 %v479, %v504
  %v530 = vsub.f32 %v480, %v505
  %v531 = vsub.f32 %v481, %v506
  %v532 = vsub.f32 %v482, %v507
  %v533 = vsub.f32 %v483, %v508
  %v534 = vsub.f32 %v484, %v509
  %v535 = vsub.f32 %v485, %v510
  %v536 = vsub.f32 %v486, %v511
  %v537 = vsub.f32 %v487, %v512
  %v538 = vsub.f32 %v488, %v513
  %v539 = vsub.f32 %v489, %v514
  %v540 = vsub.f32 %v490, %v515
  %v541 = vsub.f32 %v491, %v516
  %v542 = vsub.f32 %v492, %v517
  %v543 = vsub.f32 %v493, %v518
  %v544 = vsub.f32 %v494, %v519
  %v545 = vsub.f32 %v495, %v520
  %v546 = vmax.f32 %v521, 0.0
  %v547 = vmax.f32 %v522, 0.0
  %v548 = vmax.f32 %v523, 0.0
  %v549 = vmax.f32 %v524, 0.0
  %v550 = vmax.f32 %v525, 0.0
  %v551 = vmax.f32 %v526, 0.0
  %v552 = vmax.f32 %v527, 0.0
  %v553 = vmax.f32 %v528, 0.0
  %v554 = vmax.f32 %v529, 0.0
  %v555 = vmax.f32 %v530, 0.0
  %v556 = vmax.f32 %v531, 0.0
  %v557 = vmax.f32 %v532, 0.0
  %v558 = vmax.f32 %v533, 0.0
  %v559 = vmax.f32 %v534, 0.0
  %v560 = vmax.f32 %v535, 0.0
  %v561 = vmax.f32 %v536, 0.0
  %v562 = vmax.f32 %v537, 0.0
  %v563 = vmax.f32 %v538, 0.0
  %v564 = vmax.f32 %v539, 0.0
  %v565 = vmax.f32 %v540, 0.0
  %v566 = vmax.f32 %v541, 0.0
  %v567 = vmax.f32 %v542, 0.0
  %v568 = vmax.f32 %v543, 0.0
  %v569 = vmax.f32 %v544, 0.0
  %v570 = vmax.f32 %v545, 0.0
  %v571 = vsub.f32 %v219, %v371
  %v572 = vsub.f32 %v222, %v372
  %v573 = vsub.f32 %v227, %v373
  %v574 = vsub.f32 %v230, %v374
  %v575 = vsub.f32 %v235, %v375
  %v576 = vsub.f32 %v238, %v376
  %v577 = vsub.f32 %v243, %v377
  %v578 = vsub.f32 %v246, %v378
  %v579 = vsub.f32 %v251, %v379
  %v580 = vsub.f32 %v254, %v380
  %v581 = vsub.f32 %v259, %v381
  %v582 = vsub.f32 %v262, %v382
  %v583 = vsub.f32 %v267, %v383
  %v584 = vsub.f32 %v270, %v384
  %v585 = vsub.f32 %v275, %v385
  %v586 = vsub.f32 %v278, %v386
  %v587 = vsub.f32 %v283, %v387
  %v588 = vsub.f32 %v286, %v388
  %v589 = vsub.f32 %v291, %v389
  %v590 = vsub.f32 %v294, %v390
  %v591 = vsub.f32 %v299, %v391
  %v592 = vsub.f32 %v302, %v392
  %v593 = vsub.f32 %v307, %v393
  %v594 = vsub.f32 %v310, %v394
  %v595 = vsub.f32 %v315, %v395
  %v596 = vadd.f32 %v546, 1e-05
  %v597 = vadd.f32 %v547, 1e-05
  %v598 = vadd.f32 %v548, 1e-05
  %v599 = vadd.f32 %v549, 1e-05
  %v600 = vadd.f32 %v550, 1e-05
  %v601 = vadd.f32 %v551, 1e-05
  %v602 = vadd.f32 %v552, 1e-05
  %v603 = vadd.f32 %v553, 1e-05
  %v604 = vadd.f32 %v554, 1e-05
  %v605 = vadd.f32 %v555, 1e-05
  %v606 = vadd.f32 %v556, 1e-05
  %v607 = vadd.f32 %v557, 1e-05
  %v608 = vadd.f32 %v558, 1e-05
  %v609 = vadd.f32 %v559, 1e-05
  %v610 = vadd.f32 %v560, 1e-05
  %v611 = vadd.f32 %v561, 1e-05
  %v612 = vadd.f32 %v562, 1e-05
  %v613 = vadd.f32 %v563, 1e-05
  %v614 = vadd.f32 %v564, 1e-05
  %v615 = vadd.f32 %v565, 1e-05
  %v616 = vadd.f32 %v566, 1e-05
  %v617 = vadd.f32 %v567, 1e-05
  %v618 = vadd.f32 %v568, 1e-05
  %v619 = vadd.f32 %v569, 1e-05
  %v620 = vadd.f32 %v570, 1e-05
  %v621 = vrsqrt.pop %v596
  %v622 = vrsqrt.pop %v597
  %v623 = vrsqrt.pop %v598
  %v624 = vrsqrt.pop %v599
  %v625 = vrsqrt.pop %v600
  %v626 = vrsqrt.pop %v601
  %v627 = vrsqrt.pop %v602
  %v628 = vrsqrt.pop %v603
  %v629 = vrsqrt.pop %v604
  %v630 = vrsqrt.pop %v605
  %v631 = vrsqrt.pop %v606
  %v632 = vrsqrt.pop %v607
  %v633 = vrsqrt.pop %v608
  %v634 = vrsqrt.pop %v609
  %v635 = vrsqrt.pop %v610
  %v636 = vrsqrt.pop %v611
  %v637 = vrsqrt.pop %v612
  %v638 = vrsqrt.pop %v613
  %v639 = vrsqrt.pop %v614
  %v640 = vrsqrt.pop %v615
  %v641 = vrsqrt.pop %v616
  %v642 = vrsqrt.pop %v617
  %v643 = vrsqrt.pop %v618
  %v644 = vrsqrt.pop %v619
  %v645 = vrsqrt.pop %v620
  %v646 = vmul.f32 %v571, %v621
  %v647 = vmul.f32 %v572, %v622
  %v648 = vmul.f32 %v573, %v623
  %v649 = vmul.f32 %v574, %v624
  %v650 = vmul.f32 %v575, %v625
  %v651 = vmul.f32 %v576, %v626
  %v652 = vmul.f32 %v577, %v627
  %v653 = vmul.f32 %v578, %v628
  %v654 = vmul.f32 %v579, %v629
  %v655 = vmul.f32 %v580, %v630
  %v656 = vmul.f32 %v581, %v631
  %v657 = vmul.f32 %v582, %v632
  %v658 = vmul.f32 %v583, %v633
  %v659 = vmul.f32 %v584, %v634
  %v660 = vmul.f32 %v585, %v635
  %v661 = vmul.f32 %v586, %v636
  %v662 = vmul.f32 %v587, %v637
  %v663 = vmul.f32 %v588, %v638
  %v664 = vmul.f32 %v589, %v639
  %v665 = vmul.f32 %v590, %v640
  %v666 = vmul.f32 %v591, %v641
  %v667 = vmul.f32 %v592, %v642
  %v668 = vmul.f32 %v593, %v643
  %v669 = vmul.f32 %v594, %v644
  %v670 = vmul.f32 %v595, %v645
  %v671 = vlaneseq
  %v672 = vshrl.u32 %v671, 7
  %v673 = vsub.s32 1, %v672
  %v674 = vrot.slane %v18, %v673
  %v675 = vmul.f32 %v646, %v674
  %v676 = vmul.f32 %v647, %v674
  %v677 = vmul.f32 %v648, %v674
  %v678 = vmul.f32 %v649, %v674
  %v679 = vmul.f32 %v650, %v674
  %v680 = vmul.f32 %v651, %v674
  %v681 = vmul.f32 %v652, %v674
  %v682 = vmul.f32 %v653, %v674
  %v683 = vmul.f32 %v654, %v674
  %v684 = vmul.f32 %v655, %v674
  %v685 = vmul.f32 %v656, %v674
  %v686 = vmul.f32 %v657, %v674
  %v687 = vmul.f32 %v658, %v674
  %v688 = vmul.f32 %v659, %v674
  %v689 = vmul.f32 %v660, %v674
  %v690 = vmul.f32 %v661, %v674
  %v691 = vmul.f32 %v662, %v674
  %v692 = vmul.f32 %v663, %v674
  %v693 = vmul.f32 %v664, %v674
  %v694 = vmul.f32 %v665, %v674
  %v695 = vmul.f32 %v666, %v674
  %v696 = vmul.f32 %v667, %v674
  %v697 = vmul.f32 %v668, %v674
  %v698 = vmul.f32 %v669, %v674
  %v699 = vmul.f32 %v670, %v674
  %v700 = vlaneseq
  %v701 = vshrl.u32 %v700, 7
  %v702 = vsub.s32 2, %v701
  %v703 = vrot.slane %v18, %v702
  %v704 = vadd.f32 %v675, %v703
  %v705 = vadd.f32 %v676, %v703
  %v706 = vadd.f32 %v677, %v703
  %v707 = vadd.f32 %v678, %v703
  %v708 = vadd.f32 %v679, %v703
  %v709 = vadd.f32 %v680, %v703
  %v710 = vadd.f32 %v681, %v703
  %v711 = vadd.f32 %v682, %v703
  %v712 = vadd.f32 %v683, %v703
  %v713 = vadd.f32 %v684, %v703
  %v714 = vadd.f32 %v685, %v703
  %v715 = vadd.f32 %v686, %v703
  %v716 = vadd.f32 %v687, %v703
  %v717 = vadd.f32 %v688, %v703
  %v718 = vadd.f32 %v689, %v703
  %v719 = vadd.f32 %v690, %v703
  %v720 = vadd.f32 %v691, %v703
  %v721 = vadd.f32 %v692, %v703
  %v722 = vadd.f32 %v693, %v703
  %v723 = vadd.f32 %v694, %v703
  %v724 = vadd.f32 %v695, %v703
  %v725 = vadd.f32 %v696, %v703
  %v726 = vadd.f32 %v697, %v703
  %v727 = vadd.f32 %v698, %v703
  %v728 = vadd.f32 %v699, %v703
  %v729 = vmax.f32 %v704, 0.0
  %v730 = vmax.f32 %v705, 0.0
  %v731 = vmax.f32 %v706, 0.0
  %v732 = vmax.f32 %v707, 0.0
  %v733 = vmax.f32 %v708, 0.0
  %v734 = vmax.f32 %v709, 0.0
  %v735 = vmax.f32 %v710, 0.0
  %v736 = vmax.f32 %v711, 0.0
  %v737 = vmax.f32 %v712, 0.0
  %v738 = vmax.f32 %v713, 0.0
  %v739 = vmax.f32 %v714, 0.0
  %v740 = vmax.f32 %v715, 0.0
  %v741 = vmax.f32 %v716, 0.0
  %v742 = vmax.f32 %v717, 0.0
  %v743 = vmax.f32 %v718, 0.0
  %v744 = vmax.f32 %v719, 0.0
  %v745 = vmax.f32 %v720, 0.0
  %v746 = vmax.f32 %v721, 0.0
  %v747 = vmax.f32 %v722, 0.0
  %v748 = vmax.f32 %v723, 0.0
  %v749 = vmax.f32 %v724, 0.0
  %v750 = vmax.f32 %v725, 0.0
  %v751 = vmax.f32 %v726, 0.0
  %v752 = vmax.f32 %v727, 0.0
  %v753 = vmax.f32 %v728, 0.0
  %v754 = vld [vmem:[%s2] sm:$0xf]
  %v755 = vld [vmem:[%s2 + $0x4] sm:$0xf]
  %v756 = vld [vmem:[%s2 + $0x8] sm:$0xf]
  %v757 = vld [vmem:[%s2 + $0xc] sm:$0xf]
  %v758 = vld [vmem:[%s2 + $0x10] sm:$0xf]
  %v759 = vld [vmem:[%s2 + $0x14] sm:$0xf]
  %v760 = vld [vmem:[%s2 + $0x18] sm:$0xf]
  %v761 = vld [vmem:[%s2 + $0x1c] sm:$0xf]
  %v762 = vld [vmem:[%s2 + $0x20] sm:$0xf]
  %v763 = vld [vmem:[%s2 + $0x24] sm:$0xf]
  %v764 = vld [vmem:[%s2 + $0x28] sm:$0xf]
  %v765 = vld [vmem:[%s2 + $0x2c] sm:$0xf]
  %v766 = vld [vmem:[%s2 + $0x30] sm:$0xf]
  %v767 = vld [vmem:[%s2 + $0x34] sm:$0xf]
  %v768 = vld [vmem:[%s2 + $0x38] sm:$0xf]
  %v769 = vld [vmem:[%s2 + $0x3c] sm:$0xf]
  %v770 = vpack.c.bf16 %v730, %v729
  %v771 = vpack.c.bf16 %v732, %v731
  %v772 = vpack.c.bf16 %v734, %v733
  %v773 = vpack.c.bf16 %v736, %v735
  %v774 = vpack.c.bf16 %v738, %v737
  %v775 = vpack.c.bf16 %v740, %v739
  %v776 = vpack.c.bf16 %v742, %v741
  %v777 = vpack.c.bf16 %v744, %v743
  %v778 = vpack.c.bf16 %v746, %v745
  %v779 = vpack.c.bf16 %v748, %v747
  %v780 = vpack.c.bf16 %v750, %v749
  %v781 = vpack.c.bf16 %v752, %v751
  %v782 = vpack.c.bf16 %v753, %v753
  %v783 = vlaneseq
  %v784 = vshrl.u32 %v783, 7
  %v785 = vsub.s32 3, %v784
  %v786 = vrot.slane %v18, %v785
  %v803 = vunpack.c.l.b16 %v754
  %v804 = vunpack.c.l.b16 %v755
  %v805 = vunpack.c.l.b16 %v756
  %v806 = vunpack.c.l.b16 %v757
  %v807 = vunpack.c.l.b16 %v758
  %v808 = vunpack.c.l.b16 %v759
  %v809 = vunpack.c.l.b16 %v760
  %v810 = vunpack.c.l.b16 %v761
  %v811 = vunpack.c.l.b16 %v762
  %v812 = vunpack.c.l.b16 %v763
  %v813 = vunpack.c.l.b16 %v764
  %v814 = vunpack.c.l.b16 %v765
  %v815 = vunpack.c.l.b16 %v766
  %v816 = vunpack.c.l.b16 %v767
  %v817 = vunpack.c.l.b16 %v768
  %v818 = vunpack.c.l.b16 %v769
  %v819 = vpack.c.b16 %v804, %v803
  %v820 = vpack.c.b16 %v806, %v805
  %v821 = vpack.c.b16 %v808, %v807
  %v822 = vpack.c.b16 %v810, %v809
  %v823 = vpack.c.b16 %v812, %v811
  %v824 = vpack.c.b16 %v814, %v813
  %v825 = vpack.c.b16 %v816, %v815
  %v826 = vpack.c.b16 %v818, %v817
  %835 = vmatprep.subr.bf16.mxu0 0
  %836 = vmatpush1.bf16.msra.mxu0 %v819
  %837 = vmatprep.subr.bf16.mxu0 0
  %838 = vmatpush1.bf16.msra.mxu0 %v820
  %839 = vmatprep.subr.bf16.mxu0 0
  %840 = vmatpush1.bf16.msra.mxu0 %v821
  %841 = vmatprep.subr.bf16.mxu0 0
  %842 = vmatpush1.bf16.msra.mxu0 %v822
  %843 = vmatprep.subr.bf16.mxu0 0
  %844 = vmatpush1.bf16.msra.mxu0 %v823
  %845 = vmatprep.subr.bf16.mxu0 0
  %846 = vmatpush1.bf16.msra.mxu0 %v824
  %847 = vmatprep.subr.bf16.mxu0 0
  %848 = vmatpush1.bf16.msra.mxu0 %v825
  %849 = vmatprep.subr.bf16.mxu0 0
  %850 = vmatpush1.bf16.msra.mxu0 %v826
  %851 = vmatprep.subr.bf16.mxu0 0
  %852 = vmatpush1.bf16.msra.mxu0 0
  %853 = vmatprep.subr.bf16.mxu0 0
  %854 = vmatpush1.bf16.msra.mxu0 0
  %855 = vmatprep.subr.bf16.mxu0 0
  %856 = vmatpush1.bf16.msra.mxu0 0
  %857 = vmatprep.subr.bf16.mxu0 0
  %858 = vmatpush1.bf16.msra.mxu0 0
  %859 = vmatprep.subr.bf16.mxu0 0
  %860 = vmatpush1.bf16.msra.mxu0 0
  %861 = vmatprep.subr.bf16.mxu0 0
  %862 = vmatpush1.bf16.msra.mxu0 0
  %863 = vmatprep.subr.bf16.mxu0 0
  %864 = vmatpush1.bf16.msra.mxu0 0
  %865 = vmatprep.subr.bf16.mxu0 0
  %866 = vmatpush1.bf16.msra.mxu0 0
  %867 = vmatprep.mubr.bf16.mxu0 0
  %868 = vmatmul.mubr.bf16.gmra.mrb[0].mxu0 %v770
  %v869 = vpop.f32.mrb[0].mxu0
  %v870 = vadd.f32 %v786, %v869
  %v871 = vpop.f32.mrb[0].mxu0
  %v872 = vpop.f32.mrb[0].mxu0
  %v873 = vadd.f32 %v786, %v872
  %v874 = vpop.f32.mrb[0].mxu0
  %875 = vmatprep.mubr.bf16.mxu0 0
  %876 = vmatmul.mubr.bf16.gmra.mrb[0].mxu0 %v771
  %v877 = vpop.f32.mrb[0].mxu0
  %v878 = vadd.f32 %v786, %v877
  %v879 = vpop.f32.mrb[0].mxu0
  %v880 = vpop.f32.mrb[0].mxu0
  %v881 = vadd.f32 %v786, %v880
  %v882 = vpop.f32.mrb[0].mxu0
  %883 = vmatprep.mubr.bf16.mxu0 0
  %884 = vmatmul.mubr.bf16.gmra.mrb[0].mxu0 %v772
  %v885 = vpop.f32.mrb[0].mxu0
  %v886 = vadd.f32 %v786, %v885
  %v887 = vpop.f32.mrb[0].mxu0
  %v888 = vpop.f32.mrb[0].mxu0
  %v889 = vadd.f32 %v786, %v888
  %v890 = vpop.f32.mrb[0].mxu0
  %891 = vmatprep.mubr.bf16.mxu0 0
  %892 = vmatmul.mubr.bf16.gmra.mrb[0].mxu0 %v773
  %v893 = vpop.f32.mrb[0].mxu0
  %v894 = vadd.f32 %v786, %v893
  %v895 = vpop.f32.mrb[0].mxu0
  %v896 = vpop.f32.mrb[0].mxu0
  %v897 = vadd.f32 %v786, %v896
  %v898 = vpop.f32.mrb[0].mxu0
  %899 = vmatprep.mubr.bf16.mxu0 0
  %900 = vmatmul.mubr.bf16.gmra.mrb[0].mxu0 %v774
  %v901 = vpop.f32.mrb[0].mxu0
  %v902 = vadd.f32 %v786, %v901
  %v903 = vpop.f32.mrb[0].mxu0
  %v904 = vpop.f32.mrb[0].mxu0
  %v905 = vadd.f32 %v786, %v904
  %v906 = vpop.f32.mrb[0].mxu0
  %907 = vmatprep.mubr.bf16.mxu0 0
  %908 = vmatmul.mubr.bf16.gmra.mrb[0].mxu0 %v775
  %v909 = vpop.f32.mrb[0].mxu0
  %v910 = vadd.f32 %v786, %v909
  %v911 = vpop.f32.mrb[0].mxu0
  %v912 = vpop.f32.mrb[0].mxu0
  %v913 = vadd.f32 %v786, %v912
  %v914 = vpop.f32.mrb[0].mxu0
  %915 = vmatprep.mubr.bf16.mxu0 0
  %916 = vmatmul.mubr.bf16.gmra.mrb[0].mxu0 %v776
  %v917 = vpop.f32.mrb[0].mxu0
  %v918 = vadd.f32 %v786, %v917
  %v919 = vpop.f32.mrb[0].mxu0
  %v920 = vpop.f32.mrb[0].mxu0
  %v921 = vadd.f32 %v786, %v920
  %v922 = vpop.f32.mrb[0].mxu0
  %923 = vmatprep.mubr.bf16.mxu0 0
  %924 = vmatmul.mubr.bf16.gmra.mrb[0].mxu0 %v777
  %v925 = vpop.f32.mrb[0].mxu0
  %v926 = vadd.f32 %v786, %v925
  %v927 = vpop.f32.mrb[0].mxu0
  %v928 = vpop.f32.mrb[0].mxu0
  %v929 = vadd.f32 %v786, %v928
  %v930 = vpop.f32.mrb[0].mxu0
  %931 = vmatprep.mubr.bf16.mxu0 0
  %932 = vmatmul.mubr.bf16.gmra.mrb[0].mxu0 %v778
  %v933 = vpop.f32.mrb[0].mxu0
  %v934 = vadd.f32 %v786, %v933
  %v935 = vpop.f32.mrb[0].mxu0
  %v936 = vpop.f32.mrb[0].mxu0
  %v937 = vadd.f32 %v786, %v936
  %v938 = vpop.f32.mrb[0].mxu0
  %939 = vmatprep.mubr.bf16.mxu0 0
  %940 = vmatmul.mubr.bf16.gmra.mrb[0].mxu0 %v779
  %v941 = vpop.f32.mrb[0].mxu0
  %v942 = vadd.f32 %v786, %v941
  %v943 = vpop.f32.mrb[0].mxu0
  %v944 = vpop.f32.mrb[0].mxu0
  %v945 = vadd.f32 %v786, %v944
  %v946 = vpop.f32.mrb[0].mxu0
  %947 = vmatprep.mubr.bf16.mxu0 0
  %948 = vmatmul.mubr.bf16.gmra.mrb[0].mxu0 %v780
  %v949 = vpop.f32.mrb[0].mxu0
  %v950 = vadd.f32 %v786, %v949
  %v951 = vpop.f32.mrb[0].mxu0
  %v952 = vpop.f32.mrb[0].mxu0
  %v953 = vadd.f32 %v786, %v952
  %v954 = vpop.f32.mrb[0].mxu0
  %955 = vmatprep.mubr.bf16.mxu0 0
  %956 = vmatmul.mubr.bf16.gmra.mrb[0].mxu0 %v781
  %v957 = vpop.f32.mrb[0].mxu0
  %v958 = vadd.f32 %v786, %v957
  %v959 = vpop.f32.mrb[0].mxu0
  %v960 = vpop.f32.mrb[0].mxu0
  %v961 = vadd.f32 %v786, %v960
  %v962 = vpop.f32.mrb[0].mxu0
  %963 = vmatprep.mubr.bf16.mxu0 0
  %964 = vmatmul.mubr.bf16.gmra.mrb[0].mxu0 %v782
  %v965 = vpop.f32.mrb[0].mxu0
  %v966 = vadd.f32 %v786, %v965
  %v967 = vpop.f32.mrb[0].mxu0
  %v968 = vpop.f32.mrb[0].mxu0
  %v969 = vpop.f32.mrb[0].mxu0
  %970 = vdwg.mxu0
  %971 = vadd.xlane.f32.xlu0 %v870
  %v972 = vpop.xlane.xlu0 %971
  %973 = vadd.xlane.f32.xlu0 %v873
  %v974 = vpop.xlane.xlu0 %973
  %975 = vadd.xlane.f32.xlu0 %v878
  %v976 = vpop.xlane.xlu0 %975
  %977 = vadd.xlane.f32.xlu0 %v881
  %v978 = vpop.xlane.xlu0 %977
  %979 = vadd.xlane.f32.xlu0 %v886
  %v980 = vpop.xlane.xlu0 %979
  %981 = vadd.xlane.f32.xlu0 %v889
  %v982 = vpop.xlane.xlu0 %981
  %983 = vadd.xlane.f32.xlu0 %v894
  %v984 = vpop.xlane.xlu0 %983
  %985 = vadd.xlane.f32.xlu0 %v897
  %v986 = vpop.xlane.xlu0 %985
  %987 = vadd.xlane.f32.xlu0 %v902
  %v988 = vpop.xlane.xlu0 %987
  %989 = vadd.xlane.f32.xlu0 %v905
  %v990 = vpop.xlane.xlu0 %989
  %991 = vadd.xlane.f32.xlu0 %v910
  %v992 = vpop.xlane.xlu0 %991
  %993 = vadd.xlane.f32.xlu0 %v913
  %v994 = vpop.xlane.xlu0 %993
  %995 = vadd.xlane.f32.xlu0 %v918
  %v996 = vpop.xlane.xlu0 %995
  %997 = vadd.xlane.f32.xlu0 %v921
  %v998 = vpop.xlane.xlu0 %997
  %999 = vadd.xlane.f32.xlu0 %v926
  %v1000 = vpop.xlane.xlu0 %999
  %1001 = vadd.xlane.f32.xlu0 %v929
  %v1002 = vpop.xlane.xlu0 %1001
  %1003 = vadd.xlane.f32.xlu0 %v934
  %v1004 = vpop.xlane.xlu0 %1003
  %1005 = vadd.xlane.f32.xlu0 %v937
  %v1006 = vpop.xlane.xlu0 %1005
  %1007 = vadd.xlane.f32.xlu0 %v942
  %v1008 = vpop.xlane.xlu0 %1007
  %1009 = vadd.xlane.f32.xlu0 %v945
  %v1010 = vpop.xlane.xlu0 %1009
  %1011 = vadd.xlane.f32.xlu0 %v950
  %v1012 = vpop.xlane.xlu0 %1011
  %1013 = vadd.xlane.f32.xlu0 %v953
  %v1014 = vpop.xlane.xlu0 %1013
  %1015 = vadd.xlane.f32.xlu0 %v958
  %v1016 = vpop.xlane.xlu0 %1015
  %1017 = vadd.xlane.f32.xlu0 %v961
  %v1018 = vpop.xlane.xlu0 %1017
  %1019 = vadd.xlane.f32.xlu0 %v966
  %v1020 = vpop.xlane.xlu0 %1019
  %v1021 = vmul.f32 %v972, %v370
  %v1022 = vmul.f32 %v974, %v370
  %v1023 = vmul.f32 %v976, %v370
  %v1024 = vmul.f32 %v978, %v370
  %v1025 = vmul.f32 %v980, %v370
  %v1026 = vmul.f32 %v982, %v370
  %v1027 = vmul.f32 %v984, %v370
  %v1028 = vmul.f32 %v986, %v370
  %v1029 = vmul.f32 %v988, %v370
  %v1030 = vmul.f32 %v990, %v370
  %v1031 = vmul.f32 %v992, %v370
  %v1032 = vmul.f32 %v994, %v370
  %v1033 = vmul.f32 %v996, %v370
  %v1034 = vmul.f32 %v998, %v370
  %v1035 = vmul.f32 %v1000, %v370
  %v1036 = vmul.f32 %v1002, %v370
  %v1037 = vmul.f32 %v1004, %v370
  %v1038 = vmul.f32 %v1006, %v370
  %v1039 = vmul.f32 %v1008, %v370
  %v1040 = vmul.f32 %v1010, %v370
  %v1041 = vmul.f32 %v1012, %v370
  %v1042 = vmul.f32 %v1014, %v370
  %v1043 = vmul.f32 %v1016, %v370
  %v1044 = vmul.f32 %v1018, %v370
  %v1045 = vmul.f32 %v1020, %v370
  %v1046 = vmul.f32 %v870, %v870
  %v1047 = vmul.f32 %v873, %v873
  %v1048 = vmul.f32 %v878, %v878
  %v1049 = vmul.f32 %v881, %v881
  %v1050 = vmul.f32 %v886, %v886
  %v1051 = vmul.f32 %v889, %v889
  %v1052 = vmul.f32 %v894, %v894
  %v1053 = vmul.f32 %v897, %v897
  %v1054 = vmul.f32 %v902, %v902
  %v1055 = vmul.f32 %v905, %v905
  %v1056 = vmul.f32 %v910, %v910
  %v1057 = vmul.f32 %v913, %v913
  %v1058 = vmul.f32 %v918, %v918
  %v1059 = vmul.f32 %v921, %v921
  %v1060 = vmul.f32 %v926, %v926
  %v1061 = vmul.f32 %v929, %v929
  %v1062 = vmul.f32 %v934, %v934
  %v1063 = vmul.f32 %v937, %v937
  %v1064 = vmul.f32 %v942, %v942
  %v1065 = vmul.f32 %v945, %v945
  %v1066 = vmul.f32 %v950, %v950
  %v1067 = vmul.f32 %v953, %v953
  %v1068 = vmul.f32 %v958, %v958
  %v1069 = vmul.f32 %v961, %v961
  %v1070 = vmul.f32 %v966, %v966
  %1071 = vadd.xlane.f32.xlu0 %v1046
  %v1072 = vpop.xlane.xlu0 %1071
  %1073 = vadd.xlane.f32.xlu0 %v1047
  %v1074 = vpop.xlane.xlu0 %1073
  %1075 = vadd.xlane.f32.xlu0 %v1048
  %v1076 = vpop.xlane.xlu0 %1075
  %1077 = vadd.xlane.f32.xlu0 %v1049
  %v1078 = vpop.xlane.xlu0 %1077
  %1079 = vadd.xlane.f32.xlu0 %v1050
  %v1080 = vpop.xlane.xlu0 %1079
  %1081 = vadd.xlane.f32.xlu0 %v1051
  %v1082 = vpop.xlane.xlu0 %1081
  %1083 = vadd.xlane.f32.xlu0 %v1052
  %v1084 = vpop.xlane.xlu0 %1083
  %1085 = vadd.xlane.f32.xlu0 %v1053
  %v1086 = vpop.xlane.xlu0 %1085
  %1087 = vadd.xlane.f32.xlu0 %v1054
  %v1088 = vpop.xlane.xlu0 %1087
  %1089 = vadd.xlane.f32.xlu0 %v1055
  %v1090 = vpop.xlane.xlu0 %1089
  %1091 = vadd.xlane.f32.xlu0 %v1056
  %v1092 = vpop.xlane.xlu0 %1091
  %1093 = vadd.xlane.f32.xlu0 %v1057
  %v1094 = vpop.xlane.xlu0 %1093
  %1095 = vadd.xlane.f32.xlu0 %v1058
  %v1096 = vpop.xlane.xlu0 %1095
  %1097 = vadd.xlane.f32.xlu0 %v1059
  %v1098 = vpop.xlane.xlu0 %1097
  %1099 = vadd.xlane.f32.xlu0 %v1060
  %v1100 = vpop.xlane.xlu0 %1099
  %1101 = vadd.xlane.f32.xlu0 %v1061
  %v1102 = vpop.xlane.xlu0 %1101
  %1103 = vadd.xlane.f32.xlu0 %v1062
  %v1104 = vpop.xlane.xlu0 %1103
  %1105 = vadd.xlane.f32.xlu0 %v1063
  %v1106 = vpop.xlane.xlu0 %1105
  %1107 = vadd.xlane.f32.xlu0 %v1064
  %v1108 = vpop.xlane.xlu0 %1107
  %1109 = vadd.xlane.f32.xlu0 %v1065
  %v1110 = vpop.xlane.xlu0 %1109
  %1111 = vadd.xlane.f32.xlu0 %v1066
  %v1112 = vpop.xlane.xlu0 %1111
  %1113 = vadd.xlane.f32.xlu0 %v1067
  %v1114 = vpop.xlane.xlu0 %1113
  %1115 = vadd.xlane.f32.xlu0 %v1068
  %v1116 = vpop.xlane.xlu0 %1115
  %1117 = vadd.xlane.f32.xlu0 %v1069
  %v1118 = vpop.xlane.xlu0 %1117
  %1119 = vadd.xlane.f32.xlu0 %v1070
  %v1120 = vpop.xlane.xlu0 %1119
  %v1121 = vmul.f32 %v1072, %v370
  %v1122 = vmul.f32 %v1074, %v370
  %v1123 = vmul.f32 %v1076, %v370
  %v1124 = vmul.f32 %v1078, %v370
  %v1125 = vmul.f32 %v1080, %v370
  %v1126 = vmul.f32 %v1082, %v370
  %v1127 = vmul.f32 %v1084, %v370
  %v1128 = vmul.f32 %v1086, %v370
  %v1129 = vmul.f32 %v1088, %v370
  %v1130 = vmul.f32 %v1090, %v370
  %v1131 = vmul.f32 %v1092, %v370
  %v1132 = vmul.f32 %v1094, %v370
  %v1133 = vmul.f32 %v1096, %v370
  %v1134 = vmul.f32 %v1098, %v370
  %v1135 = vmul.f32 %v1100, %v370
  %v1136 = vmul.f32 %v1102, %v370
  %v1137 = vmul.f32 %v1104, %v370
  %v1138 = vmul.f32 %v1106, %v370
  %v1139 = vmul.f32 %v1108, %v370
  %v1140 = vmul.f32 %v1110, %v370
  %v1141 = vmul.f32 %v1112, %v370
  %v1142 = vmul.f32 %v1114, %v370
  %v1143 = vmul.f32 %v1116, %v370
  %v1144 = vmul.f32 %v1118, %v370
  %v1145 = vmul.f32 %v1120, %v370
  %v1146 = vmul.f32 %v1021, %v1021
  %v1147 = vmul.f32 %v1022, %v1022
  %v1148 = vmul.f32 %v1023, %v1023
  %v1149 = vmul.f32 %v1024, %v1024
  %v1150 = vmul.f32 %v1025, %v1025
  %v1151 = vmul.f32 %v1026, %v1026
  %v1152 = vmul.f32 %v1027, %v1027
  %v1153 = vmul.f32 %v1028, %v1028
  %v1154 = vmul.f32 %v1029, %v1029
  %v1155 = vmul.f32 %v1030, %v1030
  %v1156 = vmul.f32 %v1031, %v1031
  %v1157 = vmul.f32 %v1032, %v1032
  %v1158 = vmul.f32 %v1033, %v1033
  %v1159 = vmul.f32 %v1034, %v1034
  %v1160 = vmul.f32 %v1035, %v1035
  %v1161 = vmul.f32 %v1036, %v1036
  %v1162 = vmul.f32 %v1037, %v1037
  %v1163 = vmul.f32 %v1038, %v1038
  %v1164 = vmul.f32 %v1039, %v1039
  %v1165 = vmul.f32 %v1040, %v1040
  %v1166 = vmul.f32 %v1041, %v1041
  %v1167 = vmul.f32 %v1042, %v1042
  %v1168 = vmul.f32 %v1043, %v1043
  %v1169 = vmul.f32 %v1044, %v1044
  %v1170 = vmul.f32 %v1045, %v1045
  %v1171 = vsub.f32 %v1121, %v1146
  %v1172 = vsub.f32 %v1122, %v1147
  %v1173 = vsub.f32 %v1123, %v1148
  %v1174 = vsub.f32 %v1124, %v1149
  %v1175 = vsub.f32 %v1125, %v1150
  %v1176 = vsub.f32 %v1126, %v1151
  %v1177 = vsub.f32 %v1127, %v1152
  %v1178 = vsub.f32 %v1128, %v1153
  %v1179 = vsub.f32 %v1129, %v1154
  %v1180 = vsub.f32 %v1130, %v1155
  %v1181 = vsub.f32 %v1131, %v1156
  %v1182 = vsub.f32 %v1132, %v1157
  %v1183 = vsub.f32 %v1133, %v1158
  %v1184 = vsub.f32 %v1134, %v1159
  %v1185 = vsub.f32 %v1135, %v1160
  %v1186 = vsub.f32 %v1136, %v1161
  %v1187 = vsub.f32 %v1137, %v1162
  %v1188 = vsub.f32 %v1138, %v1163
  %v1189 = vsub.f32 %v1139, %v1164
  %v1190 = vsub.f32 %v1140, %v1165
  %v1191 = vsub.f32 %v1141, %v1166
  %v1192 = vsub.f32 %v1142, %v1167
  %v1193 = vsub.f32 %v1143, %v1168
  %v1194 = vsub.f32 %v1144, %v1169
  %v1195 = vsub.f32 %v1145, %v1170
  %v1196 = vmax.f32 %v1171, 0.0
  %v1197 = vmax.f32 %v1172, 0.0
  %v1198 = vmax.f32 %v1173, 0.0
  %v1199 = vmax.f32 %v1174, 0.0
  %v1200 = vmax.f32 %v1175, 0.0
  %v1201 = vmax.f32 %v1176, 0.0
  %v1202 = vmax.f32 %v1177, 0.0
  %v1203 = vmax.f32 %v1178, 0.0
  %v1204 = vmax.f32 %v1179, 0.0
  %v1205 = vmax.f32 %v1180, 0.0
  %v1206 = vmax.f32 %v1181, 0.0
  %v1207 = vmax.f32 %v1182, 0.0
  %v1208 = vmax.f32 %v1183, 0.0
  %v1209 = vmax.f32 %v1184, 0.0
  %v1210 = vmax.f32 %v1185, 0.0
  %v1211 = vmax.f32 %v1186, 0.0
  %v1212 = vmax.f32 %v1187, 0.0
  %v1213 = vmax.f32 %v1188, 0.0
  %v1214 = vmax.f32 %v1189, 0.0
  %v1215 = vmax.f32 %v1190, 0.0
  %v1216 = vmax.f32 %v1191, 0.0
  %v1217 = vmax.f32 %v1192, 0.0
  %v1218 = vmax.f32 %v1193, 0.0
  %v1219 = vmax.f32 %v1194, 0.0
  %v1220 = vmax.f32 %v1195, 0.0
  %v1221 = vsub.f32 %v870, %v1021
  %v1222 = vsub.f32 %v873, %v1022
  %v1223 = vsub.f32 %v878, %v1023
  %v1224 = vsub.f32 %v881, %v1024
  %v1225 = vsub.f32 %v886, %v1025
  %v1226 = vsub.f32 %v889, %v1026
  %v1227 = vsub.f32 %v894, %v1027
  %v1228 = vsub.f32 %v897, %v1028
  %v1229 = vsub.f32 %v902, %v1029
  %v1230 = vsub.f32 %v905, %v1030
  %v1231 = vsub.f32 %v910, %v1031
  %v1232 = vsub.f32 %v913, %v1032
  %v1233 = vsub.f32 %v918, %v1033
  %v1234 = vsub.f32 %v921, %v1034
  %v1235 = vsub.f32 %v926, %v1035
  %v1236 = vsub.f32 %v929, %v1036
  %v1237 = vsub.f32 %v934, %v1037
  %v1238 = vsub.f32 %v937, %v1038
  %v1239 = vsub.f32 %v942, %v1039
  %v1240 = vsub.f32 %v945, %v1040
  %v1241 = vsub.f32 %v950, %v1041
  %v1242 = vsub.f32 %v953, %v1042
  %v1243 = vsub.f32 %v958, %v1043
  %v1244 = vsub.f32 %v961, %v1044
  %v1245 = vsub.f32 %v966, %v1045
  %v1246 = vadd.f32 %v1196, 1e-05
  %v1247 = vadd.f32 %v1197, 1e-05
  %v1248 = vadd.f32 %v1198, 1e-05
  %v1249 = vadd.f32 %v1199, 1e-05
  %v1250 = vadd.f32 %v1200, 1e-05
  %v1251 = vadd.f32 %v1201, 1e-05
  %v1252 = vadd.f32 %v1202, 1e-05
  %v1253 = vadd.f32 %v1203, 1e-05
  %v1254 = vadd.f32 %v1204, 1e-05
  %v1255 = vadd.f32 %v1205, 1e-05
  %v1256 = vadd.f32 %v1206, 1e-05
  %v1257 = vadd.f32 %v1207, 1e-05
  %v1258 = vadd.f32 %v1208, 1e-05
  %v1259 = vadd.f32 %v1209, 1e-05
  %v1260 = vadd.f32 %v1210, 1e-05
  %v1261 = vadd.f32 %v1211, 1e-05
  %v1262 = vadd.f32 %v1212, 1e-05
  %v1263 = vadd.f32 %v1213, 1e-05
  %v1264 = vadd.f32 %v1214, 1e-05
  %v1265 = vadd.f32 %v1215, 1e-05
  %v1266 = vadd.f32 %v1216, 1e-05
  %v1267 = vadd.f32 %v1217, 1e-05
  %v1268 = vadd.f32 %v1218, 1e-05
  %v1269 = vadd.f32 %v1219, 1e-05
  %v1270 = vadd.f32 %v1220, 1e-05
  %v1271 = vrsqrt.pop %v1246
  %v1272 = vrsqrt.pop %v1247
  %v1273 = vrsqrt.pop %v1248
  %v1274 = vrsqrt.pop %v1249
  %v1275 = vrsqrt.pop %v1250
  %v1276 = vrsqrt.pop %v1251
  %v1277 = vrsqrt.pop %v1252
  %v1278 = vrsqrt.pop %v1253
  %v1279 = vrsqrt.pop %v1254
  %v1280 = vrsqrt.pop %v1255
  %v1281 = vrsqrt.pop %v1256
  %v1282 = vrsqrt.pop %v1257
  %v1283 = vrsqrt.pop %v1258
  %v1284 = vrsqrt.pop %v1259
  %v1285 = vrsqrt.pop %v1260
  %v1286 = vrsqrt.pop %v1261
  %v1287 = vrsqrt.pop %v1262
  %v1288 = vrsqrt.pop %v1263
  %v1289 = vrsqrt.pop %v1264
  %v1290 = vrsqrt.pop %v1265
  %v1291 = vrsqrt.pop %v1266
  %v1292 = vrsqrt.pop %v1267
  %v1293 = vrsqrt.pop %v1268
  %v1294 = vrsqrt.pop %v1269
  %v1295 = vrsqrt.pop %v1270
  %v1296 = vmul.f32 %v1221, %v1271
  %v1297 = vmul.f32 %v1222, %v1272
  %v1298 = vmul.f32 %v1223, %v1273
  %v1299 = vmul.f32 %v1224, %v1274
  %v1300 = vmul.f32 %v1225, %v1275
  %v1301 = vmul.f32 %v1226, %v1276
  %v1302 = vmul.f32 %v1227, %v1277
  %v1303 = vmul.f32 %v1228, %v1278
  %v1304 = vmul.f32 %v1229, %v1279
  %v1305 = vmul.f32 %v1230, %v1280
  %v1306 = vmul.f32 %v1231, %v1281
  %v1307 = vmul.f32 %v1232, %v1282
  %v1308 = vmul.f32 %v1233, %v1283
  %v1309 = vmul.f32 %v1234, %v1284
  %v1310 = vmul.f32 %v1235, %v1285
  %v1311 = vmul.f32 %v1236, %v1286
  %v1312 = vmul.f32 %v1237, %v1287
  %v1313 = vmul.f32 %v1238, %v1288
  %v1314 = vmul.f32 %v1239, %v1289
  %v1315 = vmul.f32 %v1240, %v1290
  %v1316 = vmul.f32 %v1241, %v1291
  %v1317 = vmul.f32 %v1242, %v1292
  %v1318 = vmul.f32 %v1243, %v1293
  %v1319 = vmul.f32 %v1244, %v1294
  %v1320 = vmul.f32 %v1245, %v1295
  %v1321 = vlaneseq
  %v1322 = vshrl.u32 %v1321, 7
  %v1323 = vsub.s32 4, %v1322
  %v1324 = vrot.slane %v18, %v1323
  %v1325 = vmul.f32 %v1296, %v1324
  %v1326 = vmul.f32 %v1297, %v1324
  %v1327 = vmul.f32 %v1298, %v1324
  %v1328 = vmul.f32 %v1299, %v1324
  %v1329 = vmul.f32 %v1300, %v1324
  %v1330 = vmul.f32 %v1301, %v1324
  %v1331 = vmul.f32 %v1302, %v1324
  %v1332 = vmul.f32 %v1303, %v1324
  %v1333 = vmul.f32 %v1304, %v1324
  %v1334 = vmul.f32 %v1305, %v1324
  %v1335 = vmul.f32 %v1306, %v1324
  %v1336 = vmul.f32 %v1307, %v1324
  %v1337 = vmul.f32 %v1308, %v1324
  %v1338 = vmul.f32 %v1309, %v1324
  %v1339 = vmul.f32 %v1310, %v1324
  %v1340 = vmul.f32 %v1311, %v1324
  %v1341 = vmul.f32 %v1312, %v1324
  %v1342 = vmul.f32 %v1313, %v1324
  %v1343 = vmul.f32 %v1314, %v1324
  %v1344 = vmul.f32 %v1315, %v1324
  %v1345 = vmul.f32 %v1316, %v1324
  %v1346 = vmul.f32 %v1317, %v1324
  %v1347 = vmul.f32 %v1318, %v1324
  %v1348 = vmul.f32 %v1319, %v1324
  %v1349 = vmul.f32 %v1320, %v1324
  %v1350 = vlaneseq
  %v1351 = vshrl.u32 %v1350, 7
  %v1352 = vsub.s32 5, %v1351
  %v1353 = vrot.slane %v18, %v1352
  %v1354 = vadd.f32 %v1325, %v1353
  %v1355 = vadd.f32 %v1326, %v1353
  %v1356 = vadd.f32 %v1327, %v1353
  %v1357 = vadd.f32 %v1328, %v1353
  %v1358 = vadd.f32 %v1329, %v1353
  %v1359 = vadd.f32 %v1330, %v1353
  %v1360 = vadd.f32 %v1331, %v1353
  %v1361 = vadd.f32 %v1332, %v1353
  %v1362 = vadd.f32 %v1333, %v1353
  %v1363 = vadd.f32 %v1334, %v1353
  %v1364 = vadd.f32 %v1335, %v1353
  %v1365 = vadd.f32 %v1336, %v1353
  %v1366 = vadd.f32 %v1337, %v1353
  %v1367 = vadd.f32 %v1338, %v1353
  %v1368 = vadd.f32 %v1339, %v1353
  %v1369 = vadd.f32 %v1340, %v1353
  %v1370 = vadd.f32 %v1341, %v1353
  %v1371 = vadd.f32 %v1342, %v1353
  %v1372 = vadd.f32 %v1343, %v1353
  %v1373 = vadd.f32 %v1344, %v1353
  %v1374 = vadd.f32 %v1345, %v1353
  %v1375 = vadd.f32 %v1346, %v1353
  %v1376 = vadd.f32 %v1347, %v1353
  %v1377 = vadd.f32 %v1348, %v1353
  %v1378 = vadd.f32 %v1349, %v1353
  %v1379 = vmax.f32 %v1354, 0.0
  %v1380 = vmax.f32 %v1355, 0.0
  %v1381 = vmax.f32 %v1356, 0.0
  %v1382 = vmax.f32 %v1357, 0.0
  %v1383 = vmax.f32 %v1358, 0.0
  %v1384 = vmax.f32 %v1359, 0.0
  %v1385 = vmax.f32 %v1360, 0.0
  %v1386 = vmax.f32 %v1361, 0.0
  %v1387 = vmax.f32 %v1362, 0.0
  %v1388 = vmax.f32 %v1363, 0.0
  %v1389 = vmax.f32 %v1364, 0.0
  %v1390 = vmax.f32 %v1365, 0.0
  %v1391 = vmax.f32 %v1366, 0.0
  %v1392 = vmax.f32 %v1367, 0.0
  %v1393 = vmax.f32 %v1368, 0.0
  %v1394 = vmax.f32 %v1369, 0.0
  %v1395 = vmax.f32 %v1370, 0.0
  %v1396 = vmax.f32 %v1371, 0.0
  %v1397 = vmax.f32 %v1372, 0.0
  %v1398 = vmax.f32 %v1373, 0.0
  %v1399 = vmax.f32 %v1374, 0.0
  %v1400 = vmax.f32 %v1375, 0.0
  %v1401 = vmax.f32 %v1376, 0.0
  %v1402 = vmax.f32 %v1377, 0.0
  %v1403 = vmax.f32 %v1378, 0.0
  %s1404 = scalar_lea.vmem %s2, 64
  %v1405 = vld [vmem:[%s1404] sm:$0xf]
  %v1406 = vld [vmem:[%s1404 + $0x4] sm:$0xf]
  %v1407 = vld [vmem:[%s1404 + $0x8] sm:$0xf]
  %v1408 = vld [vmem:[%s1404 + $0xc] sm:$0xf]
  %v1409 = vld [vmem:[%s1404 + $0x10] sm:$0xf]
  %v1410 = vld [vmem:[%s1404 + $0x14] sm:$0xf]
  %v1411 = vld [vmem:[%s1404 + $0x18] sm:$0xf]
  %v1412 = vld [vmem:[%s1404 + $0x1c] sm:$0xf]
  %v1413 = vld [vmem:[%s1404 + $0x20] sm:$0xf]
  %v1414 = vld [vmem:[%s1404 + $0x24] sm:$0xf]
  %v1415 = vld [vmem:[%s1404 + $0x28] sm:$0xf]
  %v1416 = vld [vmem:[%s1404 + $0x2c] sm:$0xf]
  %v1417 = vld [vmem:[%s1404 + $0x30] sm:$0xf]
  %v1418 = vld [vmem:[%s1404 + $0x34] sm:$0xf]
  %v1419 = vld [vmem:[%s1404 + $0x38] sm:$0xf]
  %v1420 = vld [vmem:[%s1404 + $0x3c] sm:$0xf]
  %v1421 = vpack.c.bf16 %v1380, %v1379
  %v1422 = vpack.c.bf16 %v1382, %v1381
  %v1423 = vpack.c.bf16 %v1384, %v1383
  %v1424 = vpack.c.bf16 %v1386, %v1385
  %v1425 = vpack.c.bf16 %v1388, %v1387
  %v1426 = vpack.c.bf16 %v1390, %v1389
  %v1427 = vpack.c.bf16 %v1392, %v1391
  %v1428 = vpack.c.bf16 %v1394, %v1393
  %v1429 = vpack.c.bf16 %v1396, %v1395
  %v1430 = vpack.c.bf16 %v1398, %v1397
  %v1431 = vpack.c.bf16 %v1400, %v1399
  %v1432 = vpack.c.bf16 %v1402, %v1401
  %v1433 = vpack.c.bf16 %v1403, %v1403
  %v1434 = vlaneseq
  %v1435 = vshrl.u32 %v1434, 7
  %v1436 = vsub.s32 6, %v1435
  %v1437 = vrot.slane %v18, %v1436
  %v1454 = vunpack.c.l.b16 %v1405
  %v1455 = vunpack.c.l.b16 %v1406
  %v1456 = vunpack.c.l.b16 %v1407
  %v1457 = vunpack.c.l.b16 %v1408
  %v1458 = vunpack.c.l.b16 %v1409
  %v1459 = vunpack.c.l.b16 %v1410
  %v1460 = vunpack.c.l.b16 %v1411
  %v1461 = vunpack.c.l.b16 %v1412
  %v1462 = vunpack.c.l.b16 %v1413
  %v1463 = vunpack.c.l.b16 %v1414
  %v1464 = vunpack.c.l.b16 %v1415
  %v1465 = vunpack.c.l.b16 %v1416
  %v1466 = vunpack.c.l.b16 %v1417
  %v1467 = vunpack.c.l.b16 %v1418
  %v1468 = vunpack.c.l.b16 %v1419
  %v1469 = vunpack.c.l.b16 %v1420
  %v1470 = vpack.c.b16 %v1455, %v1454
  %v1471 = vpack.c.b16 %v1457, %v1456
  %v1472 = vpack.c.b16 %v1459, %v1458
  %v1473 = vpack.c.b16 %v1461, %v1460
  %v1474 = vpack.c.b16 %v1463, %v1462
  %v1475 = vpack.c.b16 %v1465, %v1464
  %v1476 = vpack.c.b16 %v1467, %v1466
  %v1477 = vpack.c.b16 %v1469, %v1468
  %1486 = vmatprep.subr.bf16.mxu0 0
  %1487 = vmatpush1.bf16.msra.mxu0 %v1470
  %1488 = vmatprep.subr.bf16.mxu0 0
  %1489 = vmatpush1.bf16.msra.mxu0 %v1471
  %1490 = vmatprep.subr.bf16.mxu0 0
  %1491 = vmatpush1.bf16.msra.mxu0 %v1472
  %1492 = vmatprep.subr.bf16.mxu0 0
  %1493 = vmatpush1.bf16.msra.mxu0 %v1473
  %1494 = vmatprep.subr.bf16.mxu0 0
  %1495 = vmatpush1.bf16.msra.mxu0 %v1474
  %1496 = vmatprep.subr.bf16.mxu0 0
  %1497 = vmatpush1.bf16.msra.mxu0 %v1475
  %1498 = vmatprep.subr.bf16.mxu0 0
  %1499 = vmatpush1.bf16.msra.mxu0 %v1476
  %1500 = vmatprep.subr.bf16.mxu0 0
  %1501 = vmatpush1.bf16.msra.mxu0 %v1477
  %1502 = vmatprep.subr.bf16.mxu0 0
  %1503 = vmatpush1.bf16.msra.mxu0 0
  %1504 = vmatprep.subr.bf16.mxu0 0
  %1505 = vmatpush1.bf16.msra.mxu0 0
  %1506 = vmatprep.subr.bf16.mxu0 0
  %1507 = vmatpush1.bf16.msra.mxu0 0
  %1508 = vmatprep.subr.bf16.mxu0 0
  %1509 = vmatpush1.bf16.msra.mxu0 0
  %1510 = vmatprep.subr.bf16.mxu0 0
  %1511 = vmatpush1.bf16.msra.mxu0 0
  %1512 = vmatprep.subr.bf16.mxu0 0
  %1513 = vmatpush1.bf16.msra.mxu0 0
  %1514 = vmatprep.subr.bf16.mxu0 0
  %1515 = vmatpush1.bf16.msra.mxu0 0
  %1516 = vmatprep.subr.bf16.mxu0 0
  %1517 = vmatpush1.bf16.msra.mxu0 0
  %1518 = vmatprep.mubr.bf16.mxu0 0
  %1519 = vmatmul.mubr.bf16.gmra.mrb[0].mxu0 %v1421
  %v1520 = vpop.f32.mrb[0].mxu0
  %v1521 = vadd.f32 %v1437, %v1520
  %v1522 = vpop.f32.mrb[0].mxu0
  %v1523 = vpop.f32.mrb[0].mxu0
  %v1524 = vadd.f32 %v1437, %v1523
  %v1525 = vpop.f32.mrb[0].mxu0
  %1526 = vmatprep.mubr.bf16.mxu0 0
  %1527 = vmatmul.mubr.bf16.gmra.mrb[0].mxu0 %v1422
  %v1528 = vpop.f32.mrb[0].mxu0
  %v1529 = vadd.f32 %v1437, %v1528
  %v1530 = vpop.f32.mrb[0].mxu0
  %v1531 = vpop.f32.mrb[0].mxu0
  %v1532 = vadd.f32 %v1437, %v1531
  %v1533 = vpop.f32.mrb[0].mxu0
  %1534 = vmatprep.mubr.bf16.mxu0 0
  %1535 = vmatmul.mubr.bf16.gmra.mrb[0].mxu0 %v1423
  %v1536 = vpop.f32.mrb[0].mxu0
  %v1537 = vadd.f32 %v1437, %v1536
  %v1538 = vpop.f32.mrb[0].mxu0
  %v1539 = vpop.f32.mrb[0].mxu0
  %v1540 = vadd.f32 %v1437, %v1539
  %v1541 = vpop.f32.mrb[0].mxu0
  %1542 = vmatprep.mubr.bf16.mxu0 0
  %1543 = vmatmul.mubr.bf16.gmra.mrb[0].mxu0 %v1424
  %v1544 = vpop.f32.mrb[0].mxu0
  %v1545 = vadd.f32 %v1437, %v1544
  %v1546 = vpop.f32.mrb[0].mxu0
  %v1547 = vpop.f32.mrb[0].mxu0
  %v1548 = vadd.f32 %v1437, %v1547
  %v1549 = vpop.f32.mrb[0].mxu0
  %1550 = vmatprep.mubr.bf16.mxu0 0
  %1551 = vmatmul.mubr.bf16.gmra.mrb[0].mxu0 %v1425
  %v1552 = vpop.f32.mrb[0].mxu0
  %v1553 = vadd.f32 %v1437, %v1552
  %v1554 = vpop.f32.mrb[0].mxu0
  %v1555 = vpop.f32.mrb[0].mxu0
  %v1556 = vadd.f32 %v1437, %v1555
  %v1557 = vpop.f32.mrb[0].mxu0
  %1558 = vmatprep.mubr.bf16.mxu0 0
  %1559 = vmatmul.mubr.bf16.gmra.mrb[0].mxu0 %v1426
  %v1560 = vpop.f32.mrb[0].mxu0
  %v1561 = vadd.f32 %v1437, %v1560
  %v1562 = vpop.f32.mrb[0].mxu0
  %v1563 = vpop.f32.mrb[0].mxu0
  %v1564 = vadd.f32 %v1437, %v1563
  %v1565 = vpop.f32.mrb[0].mxu0
  %1566 = vmatprep.mubr.bf16.mxu0 0
  %1567 = vmatmul.mubr.bf16.gmra.mrb[0].mxu0 %v1427
  %v1568 = vpop.f32.mrb[0].mxu0
  %v1569 = vadd.f32 %v1437, %v1568
  %v1570 = vpop.f32.mrb[0].mxu0
  %v1571 = vpop.f32.mrb[0].mxu0
  %v1572 = vadd.f32 %v1437, %v1571
  %v1573 = vpop.f32.mrb[0].mxu0
  %1574 = vmatprep.mubr.bf16.mxu0 0
  %1575 = vmatmul.mubr.bf16.gmra.mrb[0].mxu0 %v1428
  %v1576 = vpop.f32.mrb[0].mxu0
  %v1577 = vadd.f32 %v1437, %v1576
  %v1578 = vpop.f32.mrb[0].mxu0
  %v1579 = vpop.f32.mrb[0].mxu0
  %v1580 = vadd.f32 %v1437, %v1579
  %v1581 = vpop.f32.mrb[0].mxu0
  %1582 = vmatprep.mubr.bf16.mxu0 0
  %1583 = vmatmul.mubr.bf16.gmra.mrb[0].mxu0 %v1429
  %v1584 = vpop.f32.mrb[0].mxu0
  %v1585 = vadd.f32 %v1437, %v1584
  %v1586 = vpop.f32.mrb[0].mxu0
  %v1587 = vpop.f32.mrb[0].mxu0
  %v1588 = vadd.f32 %v1437, %v1587
  %v1589 = vpop.f32.mrb[0].mxu0
  %1590 = vmatprep.mubr.bf16.mxu0 0
  %1591 = vmatmul.mubr.bf16.gmra.mrb[0].mxu0 %v1430
  %v1592 = vpop.f32.mrb[0].mxu0
  %v1593 = vadd.f32 %v1437, %v1592
  %v1594 = vpop.f32.mrb[0].mxu0
  %v1595 = vpop.f32.mrb[0].mxu0
  %v1596 = vadd.f32 %v1437, %v1595
  %v1597 = vpop.f32.mrb[0].mxu0
  %1598 = vmatprep.mubr.bf16.mxu0 0
  %1599 = vmatmul.mubr.bf16.gmra.mrb[0].mxu0 %v1431
  %v1600 = vpop.f32.mrb[0].mxu0
  %v1601 = vadd.f32 %v1437, %v1600
  %v1602 = vpop.f32.mrb[0].mxu0
  %v1603 = vpop.f32.mrb[0].mxu0
  %v1604 = vadd.f32 %v1437, %v1603
  %v1605 = vpop.f32.mrb[0].mxu0
  %1606 = vmatprep.mubr.bf16.mxu0 0
  %1607 = vmatmul.mubr.bf16.gmra.mrb[0].mxu0 %v1432
  %v1608 = vpop.f32.mrb[0].mxu0
  %v1609 = vadd.f32 %v1437, %v1608
  %v1610 = vpop.f32.mrb[0].mxu0
  %v1611 = vpop.f32.mrb[0].mxu0
  %v1612 = vadd.f32 %v1437, %v1611
  %v1613 = vpop.f32.mrb[0].mxu0
  %1614 = vmatprep.mubr.bf16.mxu0 0
  %1615 = vmatmul.mubr.bf16.gmra.mrb[0].mxu0 %v1433
  %v1616 = vpop.f32.mrb[0].mxu0
  %v1617 = vadd.f32 %v1437, %v1616
  %v1618 = vpop.f32.mrb[0].mxu0
  %v1619 = vpop.f32.mrb[0].mxu0
  %v1620 = vpop.f32.mrb[0].mxu0
  %1621 = vdwg.mxu0
  %1622 = vadd.xlane.f32.xlu0 %v1521
  %v1623 = vpop.xlane.xlu0 %1622
  %1624 = vadd.xlane.f32.xlu0 %v1524
  %v1625 = vpop.xlane.xlu0 %1624
  %1626 = vadd.xlane.f32.xlu0 %v1529
  %v1627 = vpop.xlane.xlu0 %1626
  %1628 = vadd.xlane.f32.xlu0 %v1532
  %v1629 = vpop.xlane.xlu0 %1628
  %1630 = vadd.xlane.f32.xlu0 %v1537
  %v1631 = vpop.xlane.xlu0 %1630
  %1632 = vadd.xlane.f32.xlu0 %v1540
  %v1633 = vpop.xlane.xlu0 %1632
  %1634 = vadd.xlane.f32.xlu0 %v1545
  %v1635 = vpop.xlane.xlu0 %1634
  %1636 = vadd.xlane.f32.xlu0 %v1548
  %v1637 = vpop.xlane.xlu0 %1636
  %1638 = vadd.xlane.f32.xlu0 %v1553
  %v1639 = vpop.xlane.xlu0 %1638
  %1640 = vadd.xlane.f32.xlu0 %v1556
  %v1641 = vpop.xlane.xlu0 %1640
  %1642 = vadd.xlane.f32.xlu0 %v1561
  %v1643 = vpop.xlane.xlu0 %1642
  %1644 = vadd.xlane.f32.xlu0 %v1564
  %v1645 = vpop.xlane.xlu0 %1644
  %1646 = vadd.xlane.f32.xlu0 %v1569
  %v1647 = vpop.xlane.xlu0 %1646
  %1648 = vadd.xlane.f32.xlu0 %v1572
  %v1649 = vpop.xlane.xlu0 %1648
  %1650 = vadd.xlane.f32.xlu0 %v1577
  %v1651 = vpop.xlane.xlu0 %1650
  %1652 = vadd.xlane.f32.xlu0 %v1580
  %v1653 = vpop.xlane.xlu0 %1652
  %1654 = vadd.xlane.f32.xlu0 %v1585
  %v1655 = vpop.xlane.xlu0 %1654
  %1656 = vadd.xlane.f32.xlu0 %v1588
  %v1657 = vpop.xlane.xlu0 %1656
  %1658 = vadd.xlane.f32.xlu0 %v1593
  %v1659 = vpop.xlane.xlu0 %1658
  %1660 = vadd.xlane.f32.xlu0 %v1596
  %v1661 = vpop.xlane.xlu0 %1660
  %1662 = vadd.xlane.f32.xlu0 %v1601
  %v1663 = vpop.xlane.xlu0 %1662
  %1664 = vadd.xlane.f32.xlu0 %v1604
  %v1665 = vpop.xlane.xlu0 %1664
  %1666 = vadd.xlane.f32.xlu0 %v1609
  %v1667 = vpop.xlane.xlu0 %1666
  %1668 = vadd.xlane.f32.xlu0 %v1612
  %v1669 = vpop.xlane.xlu0 %1668
  %1670 = vadd.xlane.f32.xlu0 %v1617
  %v1671 = vpop.xlane.xlu0 %1670
  %v1672 = vmul.f32 %v1623, %v370
  %v1673 = vmul.f32 %v1625, %v370
  %v1674 = vmul.f32 %v1627, %v370
  %v1675 = vmul.f32 %v1629, %v370
  %v1676 = vmul.f32 %v1631, %v370
  %v1677 = vmul.f32 %v1633, %v370
  %v1678 = vmul.f32 %v1635, %v370
  %v1679 = vmul.f32 %v1637, %v370
  %v1680 = vmul.f32 %v1639, %v370
  %v1681 = vmul.f32 %v1641, %v370
  %v1682 = vmul.f32 %v1643, %v370
  %v1683 = vmul.f32 %v1645, %v370
  %v1684 = vmul.f32 %v1647, %v370
  %v1685 = vmul.f32 %v1649, %v370
  %v1686 = vmul.f32 %v1651, %v370
  %v1687 = vmul.f32 %v1653, %v370
  %v1688 = vmul.f32 %v1655, %v370
  %v1689 = vmul.f32 %v1657, %v370
  %v1690 = vmul.f32 %v1659, %v370
  %v1691 = vmul.f32 %v1661, %v370
  %v1692 = vmul.f32 %v1663, %v370
  %v1693 = vmul.f32 %v1665, %v370
  %v1694 = vmul.f32 %v1667, %v370
  %v1695 = vmul.f32 %v1669, %v370
  %v1696 = vmul.f32 %v1671, %v370
  %v1697 = vmul.f32 %v1521, %v1521
  %v1698 = vmul.f32 %v1524, %v1524
  %v1699 = vmul.f32 %v1529, %v1529
  %v1700 = vmul.f32 %v1532, %v1532
  %v1701 = vmul.f32 %v1537, %v1537
  %v1702 = vmul.f32 %v1540, %v1540
  %v1703 = vmul.f32 %v1545, %v1545
  %v1704 = vmul.f32 %v1548, %v1548
  %v1705 = vmul.f32 %v1553, %v1553
  %v1706 = vmul.f32 %v1556, %v1556
  %v1707 = vmul.f32 %v1561, %v1561
  %v1708 = vmul.f32 %v1564, %v1564
  %v1709 = vmul.f32 %v1569, %v1569
  %v1710 = vmul.f32 %v1572, %v1572
  %v1711 = vmul.f32 %v1577, %v1577
  %v1712 = vmul.f32 %v1580, %v1580
  %v1713 = vmul.f32 %v1585, %v1585
  %v1714 = vmul.f32 %v1588, %v1588
  %v1715 = vmul.f32 %v1593, %v1593
  %v1716 = vmul.f32 %v1596, %v1596
  %v1717 = vmul.f32 %v1601, %v1601
  %v1718 = vmul.f32 %v1604, %v1604
  %v1719 = vmul.f32 %v1609, %v1609
  %v1720 = vmul.f32 %v1612, %v1612
  %v1721 = vmul.f32 %v1617, %v1617
  %1722 = vadd.xlane.f32.xlu0 %v1697
  %v1723 = vpop.xlane.xlu0 %1722
  %1724 = vadd.xlane.f32.xlu0 %v1698
  %v1725 = vpop.xlane.xlu0 %1724
  %1726 = vadd.xlane.f32.xlu0 %v1699
  %v1727 = vpop.xlane.xlu0 %1726
  %1728 = vadd.xlane.f32.xlu0 %v1700
  %v1729 = vpop.xlane.xlu0 %1728
  %1730 = vadd.xlane.f32.xlu0 %v1701
  %v1731 = vpop.xlane.xlu0 %1730
  %1732 = vadd.xlane.f32.xlu0 %v1702
  %v1733 = vpop.xlane.xlu0 %1732
  %1734 = vadd.xlane.f32.xlu0 %v1703
  %v1735 = vpop.xlane.xlu0 %1734
  %1736 = vadd.xlane.f32.xlu0 %v1704
  %v1737 = vpop.xlane.xlu0 %1736
  %1738 = vadd.xlane.f32.xlu0 %v1705
  %v1739 = vpop.xlane.xlu0 %1738
  %1740 = vadd.xlane.f32.xlu0 %v1706
  %v1741 = vpop.xlane.xlu0 %1740
  %1742 = vadd.xlane.f32.xlu0 %v1707
  %v1743 = vpop.xlane.xlu0 %1742
  %1744 = vadd.xlane.f32.xlu0 %v1708
  %v1745 = vpop.xlane.xlu0 %1744
  %1746 = vadd.xlane.f32.xlu0 %v1709
  %v1747 = vpop.xlane.xlu0 %1746
  %1748 = vadd.xlane.f32.xlu0 %v1710
  %v1749 = vpop.xlane.xlu0 %1748
  %1750 = vadd.xlane.f32.xlu0 %v1711
  %v1751 = vpop.xlane.xlu0 %1750
  %1752 = vadd.xlane.f32.xlu0 %v1712
  %v1753 = vpop.xlane.xlu0 %1752
  %1754 = vadd.xlane.f32.xlu0 %v1713
  %v1755 = vpop.xlane.xlu0 %1754
  %1756 = vadd.xlane.f32.xlu0 %v1714
  %v1757 = vpop.xlane.xlu0 %1756
  %1758 = vadd.xlane.f32.xlu0 %v1715
  %v1759 = vpop.xlane.xlu0 %1758
  %1760 = vadd.xlane.f32.xlu0 %v1716
  %v1761 = vpop.xlane.xlu0 %1760
  %1762 = vadd.xlane.f32.xlu0 %v1717
  %v1763 = vpop.xlane.xlu0 %1762
  %1764 = vadd.xlane.f32.xlu0 %v1718
  %v1765 = vpop.xlane.xlu0 %1764
  %1766 = vadd.xlane.f32.xlu0 %v1719
  %v1767 = vpop.xlane.xlu0 %1766
  %1768 = vadd.xlane.f32.xlu0 %v1720
  %v1769 = vpop.xlane.xlu0 %1768
  %1770 = vadd.xlane.f32.xlu0 %v1721
  %v1771 = vpop.xlane.xlu0 %1770
  %v1772 = vmul.f32 %v1723, %v370
  %v1773 = vmul.f32 %v1725, %v370
  %v1774 = vmul.f32 %v1727, %v370
  %v1775 = vmul.f32 %v1729, %v370
  %v1776 = vmul.f32 %v1731, %v370
  %v1777 = vmul.f32 %v1733, %v370
  %v1778 = vmul.f32 %v1735, %v370
  %v1779 = vmul.f32 %v1737, %v370
  %v1780 = vmul.f32 %v1739, %v370
  %v1781 = vmul.f32 %v1741, %v370
  %v1782 = vmul.f32 %v1743, %v370
  %v1783 = vmul.f32 %v1745, %v370
  %v1784 = vmul.f32 %v1747, %v370
  %v1785 = vmul.f32 %v1749, %v370
  %v1786 = vmul.f32 %v1751, %v370
  %v1787 = vmul.f32 %v1753, %v370
  %v1788 = vmul.f32 %v1755, %v370
  %v1789 = vmul.f32 %v1757, %v370
  %v1790 = vmul.f32 %v1759, %v370
  %v1791 = vmul.f32 %v1761, %v370
  %v1792 = vmul.f32 %v1763, %v370
  %v1793 = vmul.f32 %v1765, %v370
  %v1794 = vmul.f32 %v1767, %v370
  %v1795 = vmul.f32 %v1769, %v370
  %v1796 = vmul.f32 %v1771, %v370
  %v1797 = vmul.f32 %v1672, %v1672
  %v1798 = vmul.f32 %v1673, %v1673
  %v1799 = vmul.f32 %v1674, %v1674
  %v1800 = vmul.f32 %v1675, %v1675
  %v1801 = vmul.f32 %v1676, %v1676
  %v1802 = vmul.f32 %v1677, %v1677
  %v1803 = vmul.f32 %v1678, %v1678
  %v1804 = vmul.f32 %v1679, %v1679
  %v1805 = vmul.f32 %v1680, %v1680
  %v1806 = vmul.f32 %v1681, %v1681
  %v1807 = vmul.f32 %v1682, %v1682
  %v1808 = vmul.f32 %v1683, %v1683
  %v1809 = vmul.f32 %v1684, %v1684
  %v1810 = vmul.f32 %v1685, %v1685
  %v1811 = vmul.f32 %v1686, %v1686
  %v1812 = vmul.f32 %v1687, %v1687
  %v1813 = vmul.f32 %v1688, %v1688
  %v1814 = vmul.f32 %v1689, %v1689
  %v1815 = vmul.f32 %v1690, %v1690
  %v1816 = vmul.f32 %v1691, %v1691
  %v1817 = vmul.f32 %v1692, %v1692
  %v1818 = vmul.f32 %v1693, %v1693
  %v1819 = vmul.f32 %v1694, %v1694
  %v1820 = vmul.f32 %v1695, %v1695
  %v1821 = vmul.f32 %v1696, %v1696
  %v1822 = vsub.f32 %v1772, %v1797
  %v1823 = vsub.f32 %v1773, %v1798
  %v1824 = vsub.f32 %v1774, %v1799
  %v1825 = vsub.f32 %v1775, %v1800
  %v1826 = vsub.f32 %v1776, %v1801
  %v1827 = vsub.f32 %v1777, %v1802
  %v1828 = vsub.f32 %v1778, %v1803
  %v1829 = vsub.f32 %v1779, %v1804
  %v1830 = vsub.f32 %v1780, %v1805
  %v1831 = vsub.f32 %v1781, %v1806
  %v1832 = vsub.f32 %v1782, %v1807
  %v1833 = vsub.f32 %v1783, %v1808
  %v1834 = vsub.f32 %v1784, %v1809
  %v1835 = vsub.f32 %v1785, %v1810
  %v1836 = vsub.f32 %v1786, %v1811
  %v1837 = vsub.f32 %v1787, %v1812
  %v1838 = vsub.f32 %v1788, %v1813
  %v1839 = vsub.f32 %v1789, %v1814
  %v1840 = vsub.f32 %v1790, %v1815
  %v1841 = vsub.f32 %v1791, %v1816
  %v1842 = vsub.f32 %v1792, %v1817
  %v1843 = vsub.f32 %v1793, %v1818
  %v1844 = vsub.f32 %v1794, %v1819
  %v1845 = vsub.f32 %v1795, %v1820
  %v1846 = vsub.f32 %v1796, %v1821
  %v1847 = vmax.f32 %v1822, 0.0
  %v1848 = vmax.f32 %v1823, 0.0
  %v1849 = vmax.f32 %v1824, 0.0
  %v1850 = vmax.f32 %v1825, 0.0
  %v1851 = vmax.f32 %v1826, 0.0
  %v1852 = vmax.f32 %v1827, 0.0
  %v1853 = vmax.f32 %v1828, 0.0
  %v1854 = vmax.f32 %v1829, 0.0
  %v1855 = vmax.f32 %v1830, 0.0
  %v1856 = vmax.f32 %v1831, 0.0
  %v1857 = vmax.f32 %v1832, 0.0
  %v1858 = vmax.f32 %v1833, 0.0
  %v1859 = vmax.f32 %v1834, 0.0
  %v1860 = vmax.f32 %v1835, 0.0
  %v1861 = vmax.f32 %v1836, 0.0
  %v1862 = vmax.f32 %v1837, 0.0
  %v1863 = vmax.f32 %v1838, 0.0
  %v1864 = vmax.f32 %v1839, 0.0
  %v1865 = vmax.f32 %v1840, 0.0
  %v1866 = vmax.f32 %v1841, 0.0
  %v1867 = vmax.f32 %v1842, 0.0
  %v1868 = vmax.f32 %v1843, 0.0
  %v1869 = vmax.f32 %v1844, 0.0
  %v1870 = vmax.f32 %v1845, 0.0
  %v1871 = vmax.f32 %v1846, 0.0
  %v1872 = vsub.f32 %v1521, %v1672
  %v1873 = vsub.f32 %v1524, %v1673
  %v1874 = vsub.f32 %v1529, %v1674
  %v1875 = vsub.f32 %v1532, %v1675
  %v1876 = vsub.f32 %v1537, %v1676
  %v1877 = vsub.f32 %v1540, %v1677
  %v1878 = vsub.f32 %v1545, %v1678
  %v1879 = vsub.f32 %v1548, %v1679
  %v1880 = vsub.f32 %v1553, %v1680
  %v1881 = vsub.f32 %v1556, %v1681
  %v1882 = vsub.f32 %v1561, %v1682
  %v1883 = vsub.f32 %v1564, %v1683
  %v1884 = vsub.f32 %v1569, %v1684
  %v1885 = vsub.f32 %v1572, %v1685
  %v1886 = vsub.f32 %v1577, %v1686
  %v1887 = vsub.f32 %v1580, %v1687
  %v1888 = vsub.f32 %v1585, %v1688
  %v1889 = vsub.f32 %v1588, %v1689
  %v1890 = vsub.f32 %v1593, %v1690
  %v1891 = vsub.f32 %v1596, %v1691
  %v1892 = vsub.f32 %v1601, %v1692
  %v1893 = vsub.f32 %v1604, %v1693
  %v1894 = vsub.f32 %v1609, %v1694
  %v1895 = vsub.f32 %v1612, %v1695
  %v1896 = vsub.f32 %v1617, %v1696
  %v1897 = vadd.f32 %v1847, 1e-05
  %v1898 = vadd.f32 %v1848, 1e-05
  %v1899 = vadd.f32 %v1849, 1e-05
  %v1900 = vadd.f32 %v1850, 1e-05
  %v1901 = vadd.f32 %v1851, 1e-05
  %v1902 = vadd.f32 %v1852, 1e-05
  %v1903 = vadd.f32 %v1853, 1e-05
  %v1904 = vadd.f32 %v1854, 1e-05
  %v1905 = vadd.f32 %v1855, 1e-05
  %v1906 = vadd.f32 %v1856, 1e-05
  %v1907 = vadd.f32 %v1857, 1e-05
  %v1908 = vadd.f32 %v1858, 1e-05
  %v1909 = vadd.f32 %v1859, 1e-05
  %v1910 = vadd.f32 %v1860, 1e-05
  %v1911 = vadd.f32 %v1861, 1e-05
  %v1912 = vadd.f32 %v1862, 1e-05
  %v1913 = vadd.f32 %v1863, 1e-05
  %v1914 = vadd.f32 %v1864, 1e-05
  %v1915 = vadd.f32 %v1865, 1e-05
  %v1916 = vadd.f32 %v1866, 1e-05
  %v1917 = vadd.f32 %v1867, 1e-05
  %v1918 = vadd.f32 %v1868, 1e-05
  %v1919 = vadd.f32 %v1869, 1e-05
  %v1920 = vadd.f32 %v1870, 1e-05
  %v1921 = vadd.f32 %v1871, 1e-05
  %v1922 = vrsqrt.pop %v1897
  %v1923 = vrsqrt.pop %v1898
  %v1924 = vrsqrt.pop %v1899
  %v1925 = vrsqrt.pop %v1900
  %v1926 = vrsqrt.pop %v1901
  %v1927 = vrsqrt.pop %v1902
  %v1928 = vrsqrt.pop %v1903
  %v1929 = vrsqrt.pop %v1904
  %v1930 = vrsqrt.pop %v1905
  %v1931 = vrsqrt.pop %v1906
  %v1932 = vrsqrt.pop %v1907
  %v1933 = vrsqrt.pop %v1908
  %v1934 = vrsqrt.pop %v1909
  %v1935 = vrsqrt.pop %v1910
  %v1936 = vrsqrt.pop %v1911
  %v1937 = vrsqrt.pop %v1912
  %v1938 = vrsqrt.pop %v1913
  %v1939 = vrsqrt.pop %v1914
  %v1940 = vrsqrt.pop %v1915
  %v1941 = vrsqrt.pop %v1916
  %v1942 = vrsqrt.pop %v1917
  %v1943 = vrsqrt.pop %v1918
  %v1944 = vrsqrt.pop %v1919
  %v1945 = vrsqrt.pop %v1920
  %v1946 = vrsqrt.pop %v1921
  %v1947 = vmul.f32 %v1872, %v1922
  %v1948 = vmul.f32 %v1873, %v1923
  %v1949 = vmul.f32 %v1874, %v1924
  %v1950 = vmul.f32 %v1875, %v1925
  %v1951 = vmul.f32 %v1876, %v1926
  %v1952 = vmul.f32 %v1877, %v1927
  %v1953 = vmul.f32 %v1878, %v1928
  %v1954 = vmul.f32 %v1879, %v1929
  %v1955 = vmul.f32 %v1880, %v1930
  %v1956 = vmul.f32 %v1881, %v1931
  %v1957 = vmul.f32 %v1882, %v1932
  %v1958 = vmul.f32 %v1883, %v1933
  %v1959 = vmul.f32 %v1884, %v1934
  %v1960 = vmul.f32 %v1885, %v1935
  %v1961 = vmul.f32 %v1886, %v1936
  %v1962 = vmul.f32 %v1887, %v1937
  %v1963 = vmul.f32 %v1888, %v1938
  %v1964 = vmul.f32 %v1889, %v1939
  %v1965 = vmul.f32 %v1890, %v1940
  %v1966 = vmul.f32 %v1891, %v1941
  %v1967 = vmul.f32 %v1892, %v1942
  %v1968 = vmul.f32 %v1893, %v1943
  %v1969 = vmul.f32 %v1894, %v1944
  %v1970 = vmul.f32 %v1895, %v1945
  %v1971 = vmul.f32 %v1896, %v1946
  %v1972 = vlaneseq
  %v1973 = vshrl.u32 %v1972, 7
  %v1974 = vsub.s32 7, %v1973
  %v1975 = vrot.slane %v18, %v1974
  %v1976 = vmul.f32 %v1947, %v1975
  %v1977 = vmul.f32 %v1948, %v1975
  %v1978 = vmul.f32 %v1949, %v1975
  %v1979 = vmul.f32 %v1950, %v1975
  %v1980 = vmul.f32 %v1951, %v1975
  %v1981 = vmul.f32 %v1952, %v1975
  %v1982 = vmul.f32 %v1953, %v1975
  %v1983 = vmul.f32 %v1954, %v1975
  %v1984 = vmul.f32 %v1955, %v1975
  %v1985 = vmul.f32 %v1956, %v1975
  %v1986 = vmul.f32 %v1957, %v1975
  %v1987 = vmul.f32 %v1958, %v1975
  %v1988 = vmul.f32 %v1959, %v1975
  %v1989 = vmul.f32 %v1960, %v1975
  %v1990 = vmul.f32 %v1961, %v1975
  %v1991 = vmul.f32 %v1962, %v1975
  %v1992 = vmul.f32 %v1963, %v1975
  %v1993 = vmul.f32 %v1964, %v1975
  %v1994 = vmul.f32 %v1965, %v1975
  %v1995 = vmul.f32 %v1966, %v1975
  %v1996 = vmul.f32 %v1967, %v1975
  %v1997 = vmul.f32 %v1968, %v1975
  %v1998 = vmul.f32 %v1969, %v1975
  %v1999 = vmul.f32 %v1970, %v1975
  %v2000 = vmul.f32 %v1971, %v1975
  %v2001 = vlaneseq
  %v2002 = vshrl.u32 %v2001, 7
  %v2003 = vsub.s32 0, %v2002
  %v2004 = vrot.slane %v19, %v2003
  %v2005 = vadd.f32 %v1976, %v2004
  %v2006 = vadd.f32 %v1977, %v2004
  %v2007 = vadd.f32 %v1978, %v2004
  %v2008 = vadd.f32 %v1979, %v2004
  %v2009 = vadd.f32 %v1980, %v2004
  %v2010 = vadd.f32 %v1981, %v2004
  %v2011 = vadd.f32 %v1982, %v2004
  %v2012 = vadd.f32 %v1983, %v2004
  %v2013 = vadd.f32 %v1984, %v2004
  %v2014 = vadd.f32 %v1985, %v2004
  %v2015 = vadd.f32 %v1986, %v2004
  %v2016 = vadd.f32 %v1987, %v2004
  %v2017 = vadd.f32 %v1988, %v2004
  %v2018 = vadd.f32 %v1989, %v2004
  %v2019 = vadd.f32 %v1990, %v2004
  %v2020 = vadd.f32 %v1991, %v2004
  %v2021 = vadd.f32 %v1992, %v2004
  %v2022 = vadd.f32 %v1993, %v2004
  %v2023 = vadd.f32 %v1994, %v2004
  %v2024 = vadd.f32 %v1995, %v2004
  %v2025 = vadd.f32 %v1996, %v2004
  %v2026 = vadd.f32 %v1997, %v2004
  %v2027 = vadd.f32 %v1998, %v2004
  %v2028 = vadd.f32 %v1999, %v2004
  %v2029 = vadd.f32 %v2000, %v2004
  %v2030 = vmax.f32 %v2005, 0.0
  %v2031 = vmax.f32 %v2006, 0.0
  %v2032 = vmax.f32 %v2007, 0.0
  %v2033 = vmax.f32 %v2008, 0.0
  %v2034 = vmax.f32 %v2009, 0.0
  %v2035 = vmax.f32 %v2010, 0.0
  %v2036 = vmax.f32 %v2011, 0.0
  %v2037 = vmax.f32 %v2012, 0.0
  %v2038 = vmax.f32 %v2013, 0.0
  %v2039 = vmax.f32 %v2014, 0.0
  %v2040 = vmax.f32 %v2015, 0.0
  %v2041 = vmax.f32 %v2016, 0.0
  %v2042 = vmax.f32 %v2017, 0.0
  %v2043 = vmax.f32 %v2018, 0.0
  %v2044 = vmax.f32 %v2019, 0.0
  %v2045 = vmax.f32 %v2020, 0.0
  %v2046 = vmax.f32 %v2021, 0.0
  %v2047 = vmax.f32 %v2022, 0.0
  %v2048 = vmax.f32 %v2023, 0.0
  %v2049 = vmax.f32 %v2024, 0.0
  %v2050 = vmax.f32 %v2025, 0.0
  %v2051 = vmax.f32 %v2026, 0.0
  %v2052 = vmax.f32 %v2027, 0.0
  %v2053 = vmax.f32 %v2028, 0.0
  %v2054 = vmax.f32 %v2029, 0.0
  %v2055 = vlaneseq
  %v2056 = vshrl.u32 %v2055, 7
  %v2057 = vsub.s32 2, %v2056
  %v2058 = vrot.slane %v19, %v2057
  %v2059 = vmul.f32 %v2030, %v2058
  %v2060 = vmul.f32 %v2031, %v2058
  %v2061 = vmul.f32 %v2032, %v2058
  %v2062 = vmul.f32 %v2033, %v2058
  %v2063 = vmul.f32 %v2034, %v2058
  %v2064 = vmul.f32 %v2035, %v2058
  %v2065 = vmul.f32 %v2036, %v2058
  %v2066 = vmul.f32 %v2037, %v2058
  %v2067 = vmul.f32 %v2038, %v2058
  %v2068 = vmul.f32 %v2039, %v2058
  %v2069 = vmul.f32 %v2040, %v2058
  %v2070 = vmul.f32 %v2041, %v2058
  %v2071 = vmul.f32 %v2042, %v2058
  %v2072 = vmul.f32 %v2043, %v2058
  %v2073 = vmul.f32 %v2044, %v2058
  %v2074 = vmul.f32 %v2045, %v2058
  %v2075 = vmul.f32 %v2046, %v2058
  %v2076 = vmul.f32 %v2047, %v2058
  %v2077 = vmul.f32 %v2048, %v2058
  %v2078 = vmul.f32 %v2049, %v2058
  %v2079 = vmul.f32 %v2050, %v2058
  %v2080 = vmul.f32 %v2051, %v2058
  %v2081 = vmul.f32 %v2052, %v2058
  %v2082 = vmul.f32 %v2053, %v2058
  %v2083 = vmul.f32 %v2054, %v2058
  %2084 = vadd.xlane.f32.xlu0 %v2059
  %v2085 = vpop.xlane.xlu0 %2084
  %2086 = vadd.xlane.f32.xlu0 %v2060
  %v2087 = vpop.xlane.xlu0 %2086
  %2088 = vadd.xlane.f32.xlu0 %v2061
  %v2089 = vpop.xlane.xlu0 %2088
  %2090 = vadd.xlane.f32.xlu0 %v2062
  %v2091 = vpop.xlane.xlu0 %2090
  %2092 = vadd.xlane.f32.xlu0 %v2063
  %v2093 = vpop.xlane.xlu0 %2092
  %2094 = vadd.xlane.f32.xlu0 %v2064
  %v2095 = vpop.xlane.xlu0 %2094
  %2096 = vadd.xlane.f32.xlu0 %v2065
  %v2097 = vpop.xlane.xlu0 %2096
  %2098 = vadd.xlane.f32.xlu0 %v2066
  %v2099 = vpop.xlane.xlu0 %2098
  %2100 = vadd.xlane.f32.xlu0 %v2067
  %v2101 = vpop.xlane.xlu0 %2100
  %2102 = vadd.xlane.f32.xlu0 %v2068
  %v2103 = vpop.xlane.xlu0 %2102
  %2104 = vadd.xlane.f32.xlu0 %v2069
  %v2105 = vpop.xlane.xlu0 %2104
  %2106 = vadd.xlane.f32.xlu0 %v2070
  %v2107 = vpop.xlane.xlu0 %2106
  %2108 = vadd.xlane.f32.xlu0 %v2071
  %v2109 = vpop.xlane.xlu0 %2108
  %2110 = vadd.xlane.f32.xlu0 %v2072
  %v2111 = vpop.xlane.xlu0 %2110
  %2112 = vadd.xlane.f32.xlu0 %v2073
  %v2113 = vpop.xlane.xlu0 %2112
  %2114 = vadd.xlane.f32.xlu0 %v2074
  %v2115 = vpop.xlane.xlu0 %2114
  %2116 = vadd.xlane.f32.xlu0 %v2075
  %v2117 = vpop.xlane.xlu0 %2116
  %2118 = vadd.xlane.f32.xlu0 %v2076
  %v2119 = vpop.xlane.xlu0 %2118
  %2120 = vadd.xlane.f32.xlu0 %v2077
  %v2121 = vpop.xlane.xlu0 %2120
  %2122 = vadd.xlane.f32.xlu0 %v2078
  %v2123 = vpop.xlane.xlu0 %2122
  %2124 = vadd.xlane.f32.xlu0 %v2079
  %v2125 = vpop.xlane.xlu0 %2124
  %2126 = vadd.xlane.f32.xlu0 %v2080
  %v2127 = vpop.xlane.xlu0 %2126
  %2128 = vadd.xlane.f32.xlu0 %v2081
  %v2129 = vpop.xlane.xlu0 %2128
  %2130 = vadd.xlane.f32.xlu0 %v2082
  %v2131 = vpop.xlane.xlu0 %2130
  %2132 = vadd.xlane.f32.xlu0 %v2083
  %v2133 = vpop.xlane.xlu0 %2132
  %v2134 = vlaneseq
  %v2135 = vshrl.u32 %v2134, 7
  %v2136 = vsub.s32 3, %v2135
  %v2137 = vrot.slane %v19, %v2136
  %v2138 = vmul.f32 %v2030, %v2137
  %v2139 = vmul.f32 %v2031, %v2137
  %v2140 = vmul.f32 %v2032, %v2137
  %v2141 = vmul.f32 %v2033, %v2137
  %v2142 = vmul.f32 %v2034, %v2137
  %v2143 = vmul.f32 %v2035, %v2137
  %v2144 = vmul.f32 %v2036, %v2137
  %v2145 = vmul.f32 %v2037, %v2137
  %v2146 = vmul.f32 %v2038, %v2137
  %v2147 = vmul.f32 %v2039, %v2137
  %v2148 = vmul.f32 %v2040, %v2137
  %v2149 = vmul.f32 %v2041, %v2137
  %v2150 = vmul.f32 %v2042, %v2137
  %v2151 = vmul.f32 %v2043, %v2137
  %v2152 = vmul.f32 %v2044, %v2137
  %v2153 = vmul.f32 %v2045, %v2137
  %v2154 = vmul.f32 %v2046, %v2137
  %v2155 = vmul.f32 %v2047, %v2137
  %v2156 = vmul.f32 %v2048, %v2137
  %v2157 = vmul.f32 %v2049, %v2137
  %v2158 = vmul.f32 %v2050, %v2137
  %v2159 = vmul.f32 %v2051, %v2137
  %v2160 = vmul.f32 %v2052, %v2137
  %v2161 = vmul.f32 %v2053, %v2137
  %v2162 = vmul.f32 %v2054, %v2137
  %2163 = vadd.xlane.f32.xlu0 %v2138
  %v2164 = vpop.xlane.xlu0 %2163
  %2165 = vadd.xlane.f32.xlu0 %v2139
  %v2166 = vpop.xlane.xlu0 %2165
  %2167 = vadd.xlane.f32.xlu0 %v2140
  %v2168 = vpop.xlane.xlu0 %2167
  %2169 = vadd.xlane.f32.xlu0 %v2141
  %v2170 = vpop.xlane.xlu0 %2169
  %2171 = vadd.xlane.f32.xlu0 %v2142
  %v2172 = vpop.xlane.xlu0 %2171
  %2173 = vadd.xlane.f32.xlu0 %v2143
  %v2174 = vpop.xlane.xlu0 %2173
  %2175 = vadd.xlane.f32.xlu0 %v2144
  %v2176 = vpop.xlane.xlu0 %2175
  %2177 = vadd.xlane.f32.xlu0 %v2145
  %v2178 = vpop.xlane.xlu0 %2177
  %2179 = vadd.xlane.f32.xlu0 %v2146
  %v2180 = vpop.xlane.xlu0 %2179
  %2181 = vadd.xlane.f32.xlu0 %v2147
  %v2182 = vpop.xlane.xlu0 %2181
  %2183 = vadd.xlane.f32.xlu0 %v2148
  %v2184 = vpop.xlane.xlu0 %2183
  %2185 = vadd.xlane.f32.xlu0 %v2149
  %v2186 = vpop.xlane.xlu0 %2185
  %2187 = vadd.xlane.f32.xlu0 %v2150
  %v2188 = vpop.xlane.xlu0 %2187
  %2189 = vadd.xlane.f32.xlu0 %v2151
  %v2190 = vpop.xlane.xlu0 %2189
  %2191 = vadd.xlane.f32.xlu0 %v2152
  %v2192 = vpop.xlane.xlu0 %2191
  %2193 = vadd.xlane.f32.xlu0 %v2153
  %v2194 = vpop.xlane.xlu0 %2193
  %2195 = vadd.xlane.f32.xlu0 %v2154
  %v2196 = vpop.xlane.xlu0 %2195
  %2197 = vadd.xlane.f32.xlu0 %v2155
  %v2198 = vpop.xlane.xlu0 %2197
  %2199 = vadd.xlane.f32.xlu0 %v2156
  %v2200 = vpop.xlane.xlu0 %2199
  %2201 = vadd.xlane.f32.xlu0 %v2157
  %v2202 = vpop.xlane.xlu0 %2201
  %2203 = vadd.xlane.f32.xlu0 %v2158
  %v2204 = vpop.xlane.xlu0 %2203
  %2205 = vadd.xlane.f32.xlu0 %v2159
  %v2206 = vpop.xlane.xlu0 %2205
  %2207 = vadd.xlane.f32.xlu0 %v2160
  %v2208 = vpop.xlane.xlu0 %2207
  %2209 = vadd.xlane.f32.xlu0 %v2161
  %v2210 = vpop.xlane.xlu0 %2209
  %2211 = vadd.xlane.f32.xlu0 %v2162
  %v2212 = vpop.xlane.xlu0 %2211
  %v2213 = vlaneseq
  %v2214 = vand.u32 %v2213, 127
  %vm2215 = vcmp.eq.s32.totalorder %v2214, 0
  %vm2216 = vcmp.eq.s32.totalorder %v2214, 1
  %v2217 = vsel %vm2216, 1, 0
  %vm2218 = vcmp.eq.s32.totalorder %v2217, 1
  %v2219 = vsel %vm2218, %v2164, 0.0
  %v2220 = vsel %vm2218, %v2166, 0.0
  %v2221 = vsel %vm2218, %v2168, 0.0
  %v2222 = vsel %vm2218, %v2170, 0.0
  %v2223 = vsel %vm2218, %v2172, 0.0
  %v2224 = vsel %vm2218, %v2174, 0.0
  %v2225 = vsel %vm2218, %v2176, 0.0
  %v2226 = vsel %vm2218, %v2178, 0.0
  %v2227 = vsel %vm2218, %v2180, 0.0
  %v2228 = vsel %vm2218, %v2182, 0.0
  %v2229 = vsel %vm2218, %v2184, 0.0
  %v2230 = vsel %vm2218, %v2186, 0.0
  %v2231 = vsel %vm2218, %v2188, 0.0
  %v2232 = vsel %vm2218, %v2190, 0.0
  %v2233 = vsel %vm2218, %v2192, 0.0
  %v2234 = vsel %vm2218, %v2194, 0.0
  %v2235 = vsel %vm2218, %v2196, 0.0
  %v2236 = vsel %vm2218, %v2198, 0.0
  %v2237 = vsel %vm2218, %v2200, 0.0
  %v2238 = vsel %vm2218, %v2202, 0.0
  %v2239 = vsel %vm2218, %v2204, 0.0
  %v2240 = vsel %vm2218, %v2206, 0.0
  %v2241 = vsel %vm2218, %v2208, 0.0
  %v2242 = vsel %vm2218, %v2210, 0.0
  %v2243 = vsel %vm2218, %v2212, 0.0
  %v2244 = vsel %vm2215, 1, 0
  %vm2245 = vcmp.eq.s32.totalorder %v2244, 1
  %v2246 = vsel %vm2245, %v2085, %v2219
  %v2247 = vsel %vm2245, %v2087, %v2220
  %v2248 = vsel %vm2245, %v2089, %v2221
  %v2249 = vsel %vm2245, %v2091, %v2222
  %v2250 = vsel %vm2245, %v2093, %v2223
  %v2251 = vsel %vm2245, %v2095, %v2224
  %v2252 = vsel %vm2245, %v2097, %v2225
  %v2253 = vsel %vm2245, %v2099, %v2226
  %v2254 = vsel %vm2245, %v2101, %v2227
  %v2255 = vsel %vm2245, %v2103, %v2228
  %v2256 = vsel %vm2245, %v2105, %v2229
  %v2257 = vsel %vm2245, %v2107, %v2230
  %v2258 = vsel %vm2245, %v2109, %v2231
  %v2259 = vsel %vm2245, %v2111, %v2232
  %v2260 = vsel %vm2245, %v2113, %v2233
  %v2261 = vsel %vm2245, %v2115, %v2234
  %v2262 = vsel %vm2245, %v2117, %v2235
  %v2263 = vsel %vm2245, %v2119, %v2236
  %v2264 = vsel %vm2245, %v2121, %v2237
  %v2265 = vsel %vm2245, %v2123, %v2238
  %v2266 = vsel %vm2245, %v2125, %v2239
  %v2267 = vsel %vm2245, %v2127, %v2240
  %v2268 = vsel %vm2245, %v2129, %v2241
  %v2269 = vsel %vm2245, %v2131, %v2242
  %v2270 = vsel %vm2245, %v2133, %v2243
  %v2271 = vlaneseq
  %v2272 = vshrl.u32 %v2271, 7
  %v2273 = vsub.s32 1, %v2272
  %v2274 = vrot.slane %v19, %v2273
  %v2275 = vadd.f32 %v2246, %v2274
  %v2276 = vadd.f32 %v2247, %v2274
  %v2277 = vadd.f32 %v2248, %v2274
  %v2278 = vadd.f32 %v2249, %v2274
  %v2279 = vadd.f32 %v2250, %v2274
  %v2280 = vadd.f32 %v2251, %v2274
  %v2281 = vadd.f32 %v2252, %v2274
  %v2282 = vadd.f32 %v2253, %v2274
  %v2283 = vadd.f32 %v2254, %v2274
  %v2284 = vadd.f32 %v2255, %v2274
  %v2285 = vadd.f32 %v2256, %v2274
  %v2286 = vadd.f32 %v2257, %v2274
  %v2287 = vadd.f32 %v2258, %v2274
  %v2288 = vadd.f32 %v2259, %v2274
  %v2289 = vadd.f32 %v2260, %v2274
  %v2290 = vadd.f32 %v2261, %v2274
  %v2291 = vadd.f32 %v2262, %v2274
  %v2292 = vadd.f32 %v2263, %v2274
  %v2293 = vadd.f32 %v2264, %v2274
  %v2294 = vadd.f32 %v2265, %v2274
  %v2295 = vadd.f32 %v2266, %v2274
  %v2296 = vadd.f32 %v2267, %v2274
  %v2297 = vadd.f32 %v2268, %v2274
  %v2298 = vadd.f32 %v2269, %v2274
  %v2299 = vadd.f32 %v2270, %v2274
  %v2300 = vpack.c.bf16 %v2276, %v2275
  %v2301 = vpack.c.bf16 %v2278, %v2277
  %v2302 = vpack.c.bf16 %v2280, %v2279
  %v2303 = vpack.c.bf16 %v2282, %v2281
  %v2304 = vpack.c.bf16 %v2284, %v2283
  %v2305 = vpack.c.bf16 %v2286, %v2285
  %v2306 = vpack.c.bf16 %v2288, %v2287
  %v2307 = vpack.c.bf16 %v2290, %v2289
  %v2308 = vpack.c.bf16 %v2292, %v2291
  %v2309 = vpack.c.bf16 %v2294, %v2293
  %v2310 = vpack.c.bf16 %v2296, %v2295
  %v2311 = vpack.c.bf16 %v2298, %v2297
  %v2312 = vpack.c.bf16 %v2299, %v2299
  %v2326 = vunpack.c.l.b16 %v2300
  %v2327 = vunpack.c.h.b16 %v2300
  %v2328 = vunpack.c.l.b16 %v2301
  %v2329 = vunpack.c.h.b16 %v2301
  %v2330 = vunpack.c.l.b16 %v2302
  %v2331 = vunpack.c.h.b16 %v2302
  %v2332 = vunpack.c.l.b16 %v2303
  %v2333 = vunpack.c.h.b16 %v2303
  %v2334 = vunpack.c.l.b16 %v2304
  %v2335 = vunpack.c.h.b16 %v2304
  %v2336 = vunpack.c.l.b16 %v2305
  %v2337 = vunpack.c.h.b16 %v2305
  %v2338 = vunpack.c.l.b16 %v2306
  %v2339 = vunpack.c.h.b16 %v2306
  %v2340 = vunpack.c.l.b16 %v2307
  %v2341 = vunpack.c.h.b16 %v2307
  %v2342 = vunpack.c.l.b16 %v2308
  %v2343 = vunpack.c.h.b16 %v2308
  %v2344 = vunpack.c.l.b16 %v2309
  %v2345 = vunpack.c.h.b16 %v2309
  %v2346 = vunpack.c.l.b16 %v2310
  %v2347 = vunpack.c.h.b16 %v2310
  %v2348 = vunpack.c.l.b16 %v2311
  %v2349 = vunpack.c.h.b16 %v2311
  %v2350 = vunpack.c.l.b16 %v2312
  %v2351 = vpack.c.b16 %v2326, %v2326
  %v2352 = vpack.c.b16 %v2327, %v2327
  %v2353 = vpack.c.b16 %v2328, %v2328
  %v2354 = vpack.c.b16 %v2329, %v2329
  %v2355 = vpack.c.b16 %v2330, %v2330
  %v2356 = vpack.c.b16 %v2331, %v2331
  %v2357 = vpack.c.b16 %v2332, %v2332
  %v2358 = vpack.c.b16 %v2333, %v2333
  %v2359 = vpack.c.b16 %v2334, %v2334
  %v2360 = vpack.c.b16 %v2335, %v2335
  %v2361 = vpack.c.b16 %v2336, %v2336
  %v2362 = vpack.c.b16 %v2337, %v2337
  %v2363 = vpack.c.b16 %v2338, %v2338
  %v2364 = vpack.c.b16 %v2339, %v2339
  %v2365 = vpack.c.b16 %v2340, %v2340
  %v2366 = vpack.c.b16 %v2341, %v2341
  %v2367 = vpack.c.b16 %v2342, %v2342
  %v2368 = vpack.c.b16 %v2343, %v2343
  %v2369 = vpack.c.b16 %v2344, %v2344
  %v2370 = vpack.c.b16 %v2345, %v2345
  %v2371 = vpack.c.b16 %v2346, %v2346
  %v2372 = vpack.c.b16 %v2347, %v2347
  %v2373 = vpack.c.b16 %v2348, %v2348
  %v2374 = vpack.c.b16 %v2349, %v2349
  %v2375 = vpack.c.b16 %v2350, %v2350
  %2401 = vst [vmem:[%s4] sm:$0xf] %v2351
  %2402 = vst [vmem:[%s4 + $0x4] sm:$0xf] %v2352
  %2403 = vst [vmem:[%s4 + $0x8] sm:$0xf] %v2353
  %2404 = vst [vmem:[%s4 + $0xc] sm:$0xf] %v2354
  %2405 = vst [vmem:[%s4 + $0x10] sm:$0xf] %v2355
  %2406 = vst [vmem:[%s4 + $0x14] sm:$0xf] %v2356
  %2407 = vst [vmem:[%s4 + $0x18] sm:$0xf] %v2357
  %2408 = vst [vmem:[%s4 + $0x1c] sm:$0xf] %v2358
  %2409 = vst [vmem:[%s4 + $0x20] sm:$0xf] %v2359
  %2410 = vst [vmem:[%s4 + $0x24] sm:$0xf] %v2360
  %2411 = vst [vmem:[%s4 + $0x28] sm:$0xf] %v2361
  %2412 = vst [vmem:[%s4 + $0x2c] sm:$0xf] %v2362
  %2413 = vst [vmem:[%s4 + $0x30] sm:$0xf] %v2363
  %2414 = vst [vmem:[%s4 + $0x34] sm:$0xf] %v2364
  %2415 = vst [vmem:[%s4 + $0x38] sm:$0xf] %v2365
  %2416 = vst [vmem:[%s4 + $0x3c] sm:$0xf] %v2366
  %2417 = vst [vmem:[%s4 + $0x40] sm:$0xf] %v2367
  %2418 = vst [vmem:[%s4 + $0x44] sm:$0xf] %v2368
  %2419 = vst [vmem:[%s4 + $0x48] sm:$0xf] %v2369
  %2420 = vst [vmem:[%s4 + $0x4c] sm:$0xf] %v2370
  %2421 = vst [vmem:[%s4 + $0x50] sm:$0xf] %v2371
  %2422 = vst [vmem:[%s4 + $0x54] sm:$0xf] %v2372
  %2423 = vst [vmem:[%s4 + $0x58] sm:$0xf] %v2373
  %2424 = vst [vmem:[%s4 + $0x5c] sm:$0xf] %v2374
  %2425 = vst [vmem:[%s4 + $0x60] sm:$0xf] %v2375
  // Predicated region
  $region18: #{mlp_forward.1} parent=0 // pred_check
    _
  $region19: #{mlp_forward.1} parent=0 // pred_check_branch
    %2427 = sbr.rel (0) target = $region21
  $region20: #{mlp_forward.1} parent=0 // pred_region
    _
  $region21: #{mlp_forward.1} parent=0 // pred_fallthru
    _
  // Predicated region
  $region22: #{mlp_forward.1} parent=0 // pred_check
    _
  $region23: #{mlp_forward.1} parent=0 // pred_check_branch
    %2429 = sbr.rel (0) target = $region25
  $region24: #{mlp_forward.1} parent=0 // pred_region
    _
  $region25: #{mlp_forward.1} parent=0 // pred_fallthru
    _

</llo_original>
